<compile_context>
chip_gen: v5e
topology: v5e:2x2
jax: 0.10.0
libtpu: 0.0.40
codegen_flags: <defaults>
</compile_context>

<pallas_src>
import functools

import jax
import jax.numpy as jnp
from jax import lax
from jax.experimental import pallas as pl
from jax.experimental.pallas import tpu as pltpu


def _round_up(x, m):
    return ((x + m - 1) // m) * m


def _lstm_chunk_kernel(gx_ref, whh_ref, h_out_ref, c_out_ref, h_sc, c_sc, *,
                       hidden_pad, t_chunk, seq_len, needs_mask, unroll):
    """One grid step == one chunk of t_chunk LSTM steps for one batch shard.

    grid = (batch_shards [parallel], time_chunks [arbitrary / sequential]).
    """
    chunk = pl.program_id(1)
    last_chunk = pl.num_programs(1) - 1
    Hp = hidden_pad

    @pl.when(chunk == 0)
    def _():
        # h0 = None  =>  zero initial hidden / cell state for this batch shard.
        h_sc[...] = jnp.zeros_like(h_sc)
        c_sc[...] = jnp.zeros_like(c_sc)

    t_base = chunk * t_chunk

    def sigmoid(x):
        # sigmoid(x) = 0.5 * tanh(0.5 * x) + 0.5 : one EUP push + one FMA.
        return 0.5 * jnp.tanh(0.5 * x) + 0.5

    def make_loop(masked):
        def step(i, carry):
            h_prev, c_prev = carry
            gx_t = gx_ref[i]                                 # (Bsh, 4Hp) f32
            # bf16 hidden matmul with f32 accumulation.  The weight ref is read
            # inside the loop body (not hoisted) so the compiler can stream
            # tiles from VMEM rather than holding the whole (Hp,4Hp) weight in
            # vregs across the unrolled loop.
            gates = gx_t + jnp.dot(h_prev.astype(jnp.bfloat16), whh_ref[...],
                                   preferred_element_type=jnp.float32)
            # Gate slices are 128-lane aligned (Hp is a multiple of 128).
            i_g = sigmoid(gates[:, 0 * Hp:1 * Hp])
            f_g = sigmoid(gates[:, 1 * Hp:2 * Hp])
            g_g = jnp.tanh(gates[:, 2 * Hp:3 * Hp])
            o_g = sigmoid(gates[:, 3 * Hp:4 * Hp])
            c_new = f_g * c_prev + i_g * g_g
            h_new = o_g * jnp.tanh(c_new)
            if masked:  # only the final (padded) chunk pays these selects
                valid = (t_base + i) < seq_len
                h_new = jnp.where(valid, h_new, h_prev)
                c_new = jnp.where(valid, c_new, c_prev)
            return h_new, c_new

        def run(carry):
            return lax.fori_loop(0, t_chunk, step, carry, unroll=unroll)

        return run

    carry0 = (h_sc[...], c_sc[...])
    if needs_mask:
        # Only the last chunk along the time axis contains padded steps; all
        # other chunks run the unmasked body (no per-step selects).
        h_f, c_f = lax.cond(chunk == last_chunk,
                            make_loop(True), make_loop(False), carry0)
    else:
        h_f, c_f = make_loop(False)(carry0)

    h_sc[...] = h_f
    c_sc[...] = c_f

    # Output blocks are resident across the sequential time axis; store only
    # on the last chunk (no dead vector store every grid step).
    @pl.when(chunk == last_chunk)
    def _():
        h_out_ref[...] = h_f.astype(h_out_ref.dtype)
        c_out_ref[...] = c_f.astype(c_out_ref.dtype)


def lstm_final_state_pallas(gx_tm, whh_p_bf16, hidden_pad, seq_len, t_chunk,
                            bshard):
    """gx_tm: (Sp, Bp, 4Hp) precomputed input gates (time-major, padded) f32.
       whh_p_bf16: (Hp, 4Hp) padded W_hh^T, gate-blocked, bf16.
       Returns (h_n, c_n), each (Bp, Hp) float32 (state after step seq_len-1)."""
    Sp, Bp, G4 = gx_tm.shape
    Hp = hidden_pad
    assert G4 == 4 * Hp and Sp % t_chunk == 0 and Bp % bshard == 0
    num_chunks = Sp // t_chunk
    num_bshards = Bp // bshard

    kernel = functools.partial(
        _lstm_chunk_kernel, hidden_pad=Hp, t_chunk=t_chunk, seq_len=seq_len,
        needs_mask=(Sp != seq_len), unroll=min(8, t_chunk))

    h_n, c_n = pl.pallas_call(
        kernel,
        out_shape=(
            jax.ShapeDtypeStruct((Bp, Hp), jnp.float32),
            jax.ShapeDtypeStruct((Bp, Hp), jnp.float32),
        ),
        grid_spec=pltpu.PrefetchScalarGridSpec(
            num_scalar_prefetch=0,
            grid=(num_bshards, num_chunks),
            in_specs=[
                # (t_chunk, bshard, 4Hp) gx slab per (batch shard, time chunk)
                pl.BlockSpec((t_chunk, bshard, 4 * Hp), lambda b, c: (c, b, 0)),
                # Constant W_hh^T; same block index every step so the pipeliner
                # only DMAs it once.
                pl.BlockSpec((Hp, 4 * Hp), lambda b, c: (0, 0)),
            ],
            out_specs=[
                pl.BlockSpec((bshard, Hp), lambda b, c: (b, 0)),
                pl.BlockSpec((bshard, Hp), lambda b, c: (b, 0)),
            ],
            scratch_shapes=[
                pltpu.VMEM((bshard, Hp), jnp.float32),   # h carry
                pltpu.VMEM((bshard, Hp), jnp.float32),   # c carry
            ],
        ),
        compiler_params=pltpu.CompilerParams(
            # Batch shards are independent (megacore); the time recurrence is
            # strictly sequential.
            dimension_semantics=("parallel", "arbitrary"),
        ),
    )(gx_tm, whh_p_bf16)
    return h_n, c_n


class EncoderPallas:
    """JAX/Pallas port of the PyTorch Encoder (num_layers=1)."""

    def __init__(self, num_embeddings, embedding_dims=50, hidden_size=50,
                 num_layers=1, dropout=0.2, key=None):
        assert num_layers == 1, "single-layer LSTM only"
        self.V = num_embeddings
        self.E = embedding_dims
        self.H = hidden_size
        if key is None:
            key = jax.random.PRNGKey(42)
        k_emb, k_wih, k_whh, k_bih, k_bhh = jax.random.split(key, 5)

        # nn.Embedding: N(0,1) init
        self.emb_w = jax.random.normal(k_emb, (num_embeddings, embedding_dims),
                                       dtype=jnp.float32)
        # nn.LSTM: U(-1/sqrt(H), 1/sqrt(H)) init, gate order (i, f, g, o)
        bound = 1.0 / (hidden_size ** 0.5)
        self.w_ih = jax.random.uniform(k_wih, (4 * hidden_size, embedding_dims),
                                       minval=-bound, maxval=bound,
                                       dtype=jnp.float32)
        self.w_hh = jax.random.uniform(k_whh, (4 * hidden_size, hidden_size),
                                       minval=-bound, maxval=bound,
                                       dtype=jnp.float32)
        self.b_ih = jax.random.uniform(k_bih, (4 * hidden_size,),
                                       minval=-bound, maxval=bound,
                                       dtype=jnp.float32)
        self.b_hh = jax.random.uniform(k_bhh, (4 * hidden_size,),
                                       minval=-bound, maxval=bound,
                                       dtype=jnp.float32)

        H = hidden_size
        Hp = _round_up(H, 128)        # each gate gets a 128-lane-aligned region
        self.Hp = Hp

        # Fused embedding + input projection table (V, 4Hp), f32, computed at
        # highest precision so it matches the f32 reference:
        #   G_table[v, g*Hp : g*Hp+H] = emb[v] @ W_ih[g]^T + (b_ih+b_hh)[g]
        g_table = (jnp.dot(self.emb_w, self.w_ih.T,
                           precision=jax.lax.Precision.HIGHEST)
                   + (self.b_ih + self.b_hh))                          # (V, 4H)
        g_table = g_table.reshape(num_embeddings, 4, H)
        self.g_table_p = (jnp.zeros((num_embeddings, 4, Hp), jnp.float32)
                          .at[:, :, :H].set(g_table)
                          .reshape(num_embeddings, 4 * Hp))
        # TODO(synk): on v5e, store the gx stream in bf16 (or stream embeddings
        # and do the input projection per chunk in-kernel) to cut HBM bytes.

        # Padded W_hh^T (Hp, 4Hp), gate-blocked, stored bf16 (MXU-native on all
        # generations; f32 accumulation happens in the kernel).  Zero rows for
        # the padded h lanes keep padding from contaminating real gates.
        whh_t = self.w_hh.T.reshape(H, 4, H)                           # (H,4,H)
        whh_p = (jnp.zeros((Hp, 4, Hp), jnp.float32)
                 .at[:H, :, :H].set(whh_t)
                 .reshape(Hp, 4 * Hp))
        self.whh_p = whh_p.astype(jnp.bfloat16)

    def __call__(self, x):
        """x: (B, S) int32 token ids.  Returns (h_n, c_n), each (1, B, H)."""
        B, S = x.shape
        H, Hp = self.H, self.Hp

        Bp = _round_up(max(B, 8), 8)
        # Shard the (padded) batch across a leading parallel grid axis so the
        # second TensorCore on v7x does useful work for non-trivial batches.
        if Bp >= 16:
            bshard = _round_up((Bp + 1) // 2, 8)
            Bp = 2 * bshard
        else:
            bshard = Bp

        # Time chunking: one grid step per chunk amortizes the ~0.35us grid
        # step overhead.  256 x (bshard, 4Hp) f32 is ~4 MiB per buffer — well
        # inside the default scoped VMEM limit on every generation.
        t_chunk = S if S <= 256 else 256
        Sp = _round_up(S, t_chunk)

        # Glue (plain XLA): fused-table gather == embedding lookup + input
        # projection + bias, gathered directly in time-major layout (single
        # HBM write of the slab; no transpose + zeros().at[].set() passes).
        gx = jnp.take(self.g_table_p, x.T, axis=0)           # (S, B, 4Hp)
        gx = jnp.pad(gx, ((0, Sp - S), (0, Bp - B), (0, 0)))  # (Sp, Bp, 4Hp)

        h_p, c_p = lstm_final_state_pallas(gx, self.whh_p, Hp, S, t_chunk,
                                           bshard)
        h_n = h_p[:B, :H][None, ...]
        c_n = c_p[:B, :H][None, ...]
        return h_n, c_n
        # TODO(synk): pack_padded_sequence (l is not None) and non-None h0
        # paths are not implemented; this is the default forward(x) path only.


def _lstm_reference(x_emb, w_ih, w_hh, b_ih, b_hh, H):
    """Pure-JAX f32 reference (batch-first input), for correctness check."""
    B, S, _ = x_emb.shape
    h = jnp.zeros((B, H), jnp.float32)
    c = jnp.zeros((B, H), jnp.float32)
    hp = jax.lax.Precision.HIGHEST
    for t in range(S):
        gates = (jnp.dot(x_emb[:, t], w_ih.T, precision=hp)
                 + jnp.dot(h, w_hh.T, precision=hp) + b_ih + b_hh)
        i = jax.nn.sigmoid(gates[:, 0 * H:1 * H])
        f = jax.nn.sigmoid(gates[:, 1 * H:2 * H])
        g = jnp.tanh(gates[:, 2 * H:3 * H])
        o = jax.nn.sigmoid(gates[:, 3 * H:4 * H])
        c = f * c + i * g
        h = o * jnp.tanh(c)
    return h, c


if __name__ == "__main__":
    num_embeddings = 20
    embedding_dims = 32
    hidden_size = 32
    batch = 2
    seq = 8

    enc = EncoderPallas(num_embeddings, embedding_dims, hidden_size,
                        num_layers=1, dropout=0.2,
                        key=jax.random.PRNGKey(42))

    key = jax.random.PRNGKey(0)
    x = jax.random.randint(key, (batch, seq), 0, num_embeddings, dtype=jnp.int32)

    h_n, c_n = enc(x)
    jax.block_until_ready((h_n, c_n))

    # Sanity-check against a pure-JAX f32 reference (bf16 hidden matmul in the
    # kernel => slightly looser tolerance).
    x_emb = jnp.take(enc.emb_w, x, axis=0)
    h_ref, c_ref = _lstm_reference(x_emb, enc.w_ih, enc.w_hh,
                                   enc.b_ih, enc.b_hh, hidden_size)
    assert h_n.shape == (1, batch, hidden_size)
    assert c_n.shape == (1, batch, hidden_size)
    assert jnp.allclose(h_n[0], h_ref, atol=2e-2, rtol=2e-2)
    assert jnp.allclose(c_n[0], c_ref, atol=2e-2, rtol=2e-2)

    print("KERNEL_OK")
</pallas_src>

<mosaic_0001>
module attributes {stable_mosaic.version = 11 : i64} {
  func.func @_lstm_chunk_kernel(%arg0: i32, %arg1: i32, %arg2: memref<8x8x512xf32, #tpu.memory_space<vmem>>, %arg3: memref<128x512xbf16, #tpu.memory_space<vmem>>, %arg4: memref<8x128xf32, #tpu.memory_space<vmem>>, %arg5: memref<8x128xf32, #tpu.memory_space<vmem>>, %arg6: memref<8x128xf32, #tpu.memory_space<vmem>>, %arg7: memref<8x128xf32, #tpu.memory_space<vmem>>) attributes {dimension_semantics = [#tpu.dimension_semantics<parallel>, #tpu.dimension_semantics<arbitrary>], iteration_bounds = array<i64: 1, 1>, scalar_prefetch = 0 : i64, scratch_operands = 2 : i64, tpu.core_type = #tpu.core_type<tc>, window_params = [{transform_indices = @transform_0, window_bounds = array<i64: 8, 8, 512>}, {pipeline_mode = #tpu.pipeline_mode<synchronous>, transform_indices = @transform_1, window_bounds = array<i64: 128, 512>}, {transform_indices = @transform_2, window_bounds = array<i64: 8, 128>}, {transform_indices = @transform_3, window_bounds = array<i64: 8, 128>}]} {
    %c0_i32 = arith.constant 0 : i32
    %0 = arith.cmpi eq, %arg1, %c0_i32 : i32
    %1 = arith.extui %0 : i1 to i32
    %c0_i32_0 = arith.constant 0 : i32
    %2 = arith.cmpi ne, %1, %c0_i32_0 : i32
    scf.if %2 {
      %cst_122 = arith.constant 0.000000e+00 : f32
      %314 = vector.broadcast %cst_122 : f32 to vector<8x128xf32>
      %c0_123 = arith.constant 0 : index
      %c0_124 = arith.constant 0 : index
      %315 = vector.load %arg6[%c0_123, %c0_124] : memref<8x128xf32, #tpu.memory_space<vmem>>, vector<8x128xf32>
      tpu.vector_store %arg6[%c0_123, %c0_124], %314 {strides = array<i32>} : memref<8x128xf32, #tpu.memory_space<vmem>>, vector<8x128xf32>,
      %cst_125 = arith.constant 0.000000e+00 : f32
      %316 = vector.broadcast %cst_125 : f32 to vector<8x128xf32>
      %c0_126 = arith.constant 0 : index
      %c0_127 = arith.constant 0 : index
      %317 = vector.load %arg7[%c0_126, %c0_127] : memref<8x128xf32, #tpu.memory_space<vmem>>, vector<8x128xf32>
      tpu.vector_store %arg7[%c0_126, %c0_127], %316 {strides = array<i32>} : memref<8x128xf32, #tpu.memory_space<vmem>>, vector<8x128xf32>,
    } else {
    }
    %c0 = arith.constant 0 : index
    %c0_1 = arith.constant 0 : index
    %3 = vector.load %arg6[%c0, %c0_1] : memref<8x128xf32, #tpu.memory_space<vmem>>, vector<8x128xf32>
    %c0_2 = arith.constant 0 : index
    %c0_3 = arith.constant 0 : index
    %4 = vector.load %arg7[%c0_2, %c0_3] : memref<8x128xf32, #tpu.memory_space<vmem>>, vector<8x128xf32>
    %c0_i32_4 = arith.constant 0 : i32
    %5 = arith.index_cast %c0_i32_4 : i32 to index
    %c0_5 = arith.constant 0 : index
    %c0_6 = arith.constant 0 : index
    %6 = vector.load %arg2[%5, %c0_5, %c0_6] : memref<8x8x512xf32, #tpu.memory_space<vmem>>, vector<1x8x512xf32>
    %7 = vector.shape_cast %6 : vector<1x8x512xf32> to vector<8x512xf32>
    %8 = arith.truncf %3 : vector<8x128xf32> to vector<8x128xbf16>
    %c0_7 = arith.constant 0 : index
    %c0_8 = arith.constant 0 : index
    %9 = vector.load %arg3[%c0_7, %c0_8] : memref<128x512xbf16, #tpu.memory_space<vmem>>, vector<128x512xbf16>
    %cst = arith.constant dense<0.000000e+00> : vector<8x512xf32>
    %10 = tpu.matmul %8, %9, %cst {dimension_numbers = #tpu.dot_dimension_numbers<[1], [0], [0], [1], [0, 0, 1, 1], [], []>} : vector<8x128xbf16>, vector<128x512xbf16>, vector<8x512xf32> -> vector<8x512xf32>
    %11 = arith.addf %7, %10 : vector<8x512xf32>
    %12 = vector.extract_strided_slice %11 {offsets = [0, 0], sizes = [8, 128], strides = [1, 1]} : vector<8x512xf32> to vector<8x128xf32>
    %cst_9 = arith.constant 5.000000e-01 : f32
    %13 = vector.broadcast %cst_9 : f32 to vector<8x128xf32>
    %14 = arith.mulf %13, %12 : vector<8x128xf32>
    %15 = math.tanh %14 : vector<8x128xf32>
    %cst_10 = arith.constant 5.000000e-01 : f32
    %16 = vector.broadcast %cst_10 : f32 to vector<8x128xf32>
    %17 = arith.mulf %16, %15 : vector<8x128xf32>
    %cst_11 = arith.constant 5.000000e-01 : f32
    %18 = vector.broadcast %cst_11 : f32 to vector<8x128xf32>
    %19 = arith.addf %17, %18 : vector<8x128xf32>
    %20 = vector.extract_strided_slice %11 {offsets = [0, 128], sizes = [8, 128], strides = [1, 1]} : vector<8x512xf32> to vector<8x128xf32>
    %cst_12 = arith.constant 5.000000e-01 : f32
    %21 = vector.broadcast %cst_12 : f32 to vector<8x128xf32>
    %22 = arith.mulf %21, %20 : vector<8x128xf32>
    %23 = math.tanh %22 : vector<8x128xf32>
    %cst_13 = arith.constant 5.000000e-01 : f32
    %24 = vector.broadcast %cst_13 : f32 to vector<8x128xf32>
    %25 = arith.mulf %24, %23 : vector<8x128xf32>
    %cst_14 = arith.constant 5.000000e-01 : f32
    %26 = vector.broadcast %cst_14 : f32 to vector<8x128xf32>
    %27 = arith.addf %25, %26 : vector<8x128xf32>
    %28 = vector.extract_strided_slice %11 {offsets = [0, 256], sizes = [8, 128], strides = [1, 1]} : vector<8x512xf32> to vector<8x128xf32>
    %29 = math.tanh %28 : vector<8x128xf32>
    %30 = vector.extract_strided_slice %11 {offsets = [0, 384], sizes = [8, 128], strides = [1, 1]} : vector<8x512xf32> to vector<8x128xf32>
    %cst_15 = arith.constant 5.000000e-01 : f32
    %31 = vector.broadcast %cst_15 : f32 to vector<8x128xf32>
    %32 = arith.mulf %31, %30 : vector<8x128xf32>
    %33 = math.tanh %32 : vector<8x128xf32>
    %cst_16 = arith.constant 5.000000e-01 : f32
    %34 = vector.broadcast %cst_16 : f32 to vector<8x128xf32>
    %35 = arith.mulf %34, %33 : vector<8x128xf32>
    %cst_17 = arith.constant 5.000000e-01 : f32
    %36 = vector.broadcast %cst_17 : f32 to vector<8x128xf32>
    %37 = arith.addf %35, %36 : vector<8x128xf32>
    %38 = arith.mulf %27, %4 : vector<8x128xf32>
    %39 = arith.mulf %19, %29 : vector<8x128xf32>
    %40 = arith.addf %38, %39 : vector<8x128xf32>
    %41 = math.tanh %40 : vector<8x128xf32>
    %42 = arith.mulf %37, %41 : vector<8x128xf32>
    %c1_i32 = arith.constant 1 : i32
    %43 = arith.index_cast %c1_i32 : i32 to index
    %c0_18 = arith.constant 0 : index
    %c0_19 = arith.constant 0 : index
    %44 = vector.load %arg2[%43, %c0_18, %c0_19] : memref<8x8x512xf32, #tpu.memory_space<vmem>>, vector<1x8x512xf32>
    %45 = vector.shape_cast %44 : vector<1x8x512xf32> to vector<8x512xf32>
    %46 = arith.truncf %42 : vector<8x128xf32> to vector<8x128xbf16>
    %c0_20 = arith.constant 0 : index
    %c0_21 = arith.constant 0 : index
    %47 = vector.load %arg3[%c0_20, %c0_21] : memref<128x512xbf16, #tpu.memory_space<vmem>>, vector<128x512xbf16>
    %cst_22 = arith.constant dense<0.000000e+00> : vector<8x512xf32>
    %48 = tpu.matmul %46, %47, %cst_22 {dimension_numbers = #tpu.dot_dimension_numbers<[1], [0], [0], [1], [0, 0, 1, 1], [], []>} : vector<8x128xbf16>, vector<128x512xbf16>, vector<8x512xf32> -> vector<8x512xf32>
    %49 = arith.addf %45, %48 : vector<8x512xf32>
    %50 = vector.extract_strided_slice %49 {offsets = [0, 0], sizes = [8, 128], strides = [1, 1]} : vector<8x512xf32> to vector<8x128xf32>
    %cst_23 = arith.constant 5.000000e-01 : f32
    %51 = vector.broadcast %cst_23 : f32 to vector<8x128xf32>
    %52 = arith.mulf %51, %50 : vector<8x128xf32>
    %53 = math.tanh %52 : vector<8x128xf32>
    %cst_24 = arith.constant 5.000000e-01 : f32
    %54 = vector.broadcast %cst_24 : f32 to vector<8x128xf32>
    %55 = arith.mulf %54, %53 : vector<8x128xf32>
    %cst_25 = arith.constant 5.000000e-01 : f32
    %56 = vector.broadcast %cst_25 : f32 to vector<8x128xf32>
    %57 = arith.addf %55, %56 : vector<8x128xf32>
    %58 = vector.extract_strided_slice %49 {offsets = [0, 128], sizes = [8, 128], strides = [1, 1]} : vector<8x512xf32> to vector<8x128xf32>
    %cst_26 = arith.constant 5.000000e-01 : f32
    %59 = vector.broadcast %cst_26 : f32 to vector<8x128xf32>
    %60 = arith.mulf %59, %58 : vector<8x128xf32>
    %61 = math.tanh %60 : vector<8x128xf32>
    %cst_27 = arith.constant 5.000000e-01 : f32
    %62 = vector.broadcast %cst_27 : f32 to vector<8x128xf32>
    %63 = arith.mulf %62, %61 : vector<8x128xf32>
    %cst_28 = arith.constant 5.000000e-01 : f32
    %64 = vector.broadcast %cst_28 : f32 to vector<8x128xf32>
    %65 = arith.addf %63, %64 : vector<8x128xf32>
    %66 = vector.extract_strided_slice %49 {offsets = [0, 256], sizes = [8, 128], strides = [1, 1]} : vector<8x512xf32> to vector<8x128xf32>
    %67 = math.tanh %66 : vector<8x128xf32>
    %68 = vector.extract_strided_slice %49 {offsets = [0, 384], sizes = [8, 128], strides = [1, 1]} : vector<8x512xf32> to vector<8x128xf32>
    %cst_29 = arith.constant 5.000000e-01 : f32
    %69 = vector.broadcast %cst_29 : f32 to vector<8x128xf32>
    %70 = arith.mulf %69, %68 : vector<8x128xf32>
    %71 = math.tanh %70 : vector<8x128xf32>
    %cst_30 = arith.constant 5.000000e-01 : f32
    %72 = vector.broadcast %cst_30 : f32 to vector<8x128xf32>
    %73 = arith.mulf %72, %71 : vector<8x128xf32>
    %cst_31 = arith.constant 5.000000e-01 : f32
    %74 = vector.broadcast %cst_31 : f32 to vector<8x128xf32>
    %75 = arith.addf %73, %74 : vector<8x128xf32>
    %76 = arith.mulf %65, %40 : vector<8x128xf32>
    %77 = arith.mulf %57, %67 : vector<8x128xf32>
    %78 = arith.addf %76, %77 : vector<8x128xf32>
    %79 = math.tanh %78 : vector<8x128xf32>
    %80 = arith.mulf %75, %79 : vector<8x128xf32>
    %c2_i32 = arith.constant 2 : i32
    %81 = arith.index_cast %c2_i32 : i32 to index
    %c0_32 = arith.constant 0 : index
    %c0_33 = arith.constant 0 : index
    %82 = vector.load %arg2[%81, %c0_32, %c0_33] : memref<8x8x512xf32, #tpu.memory_space<vmem>>, vector<1x8x512xf32>
    %83 = vector.shape_cast %82 : vector<1x8x512xf32> to vector<8x512xf32>
    %84 = arith.truncf %80 : vector<8x128xf32> to vector<8x128xbf16>
    %c0_34 = arith.constant 0 : index
    %c0_35 = arith.constant 0 : index
    %85 = vector.load %arg3[%c0_34, %c0_35] : memref<128x512xbf16, #tpu.memory_space<vmem>>, vector<128x512xbf16>
    %cst_36 = arith.constant dense<0.000000e+00> : vector<8x512xf32>
    %86 = tpu.matmul %84, %85, %cst_36 {dimension_numbers = #tpu.dot_dimension_numbers<[1], [0], [0], [1], [0, 0, 1, 1], [], []>} : vector<8x128xbf16>, vector<128x512xbf16>, vector<8x512xf32> -> vector<8x512xf32>
    %87 = arith.addf %83, %86 : vector<8x512xf32>
    %88 = vector.extract_strided_slice %87 {offsets = [0, 0], sizes = [8, 128], strides = [1, 1]} : vector<8x512xf32> to vector<8x128xf32>
    %cst_37 = arith.constant 5.000000e-01 : f32
    %89 = vector.broadcast %cst_37 : f32 to vector<8x128xf32>
    %90 = arith.mulf %89, %88 : vector<8x128xf32>
    %91 = math.tanh %90 : vector<8x128xf32>
    %cst_38 = arith.constant 5.000000e-01 : f32
    %92 = vector.broadcast %cst_38 : f32 to vector<8x128xf32>
    %93 = arith.mulf %92, %91 : vector<8x128xf32>
    %cst_39 = arith.constant 5.000000e-01 : f32
    %94 = vector.broadcast %cst_39 : f32 to vector<8x128xf32>
    %95 = arith.addf %93, %94 : vector<8x128xf32>
    %96 = vector.extract_strided_slice %87 {offsets = [0, 128], sizes = [8, 128], strides = [1, 1]} : vector<8x512xf32> to vector<8x128xf32>
    %cst_40 = arith.constant 5.000000e-01 : f32
    %97 = vector.broadcast %cst_40 : f32 to vector<8x128xf32>
    %98 = arith.mulf %97, %96 : vector<8x128xf32>
    %99 = math.tanh %98 : vector<8x128xf32>
    %cst_41 = arith.constant 5.000000e-01 : f32
    %100 = vector.broadcast %cst_41 : f32 to vector<8x128xf32>
    %101 = arith.mulf %100, %99 : vector<8x128xf32>
    %cst_42 = arith.constant 5.000000e-01 : f32
    %102 = vector.broadcast %cst_42 : f32 to vector<8x128xf32>
    %103 = arith.addf %101, %102 : vector<8x128xf32>
    %104 = vector.extract_strided_slice %87 {offsets = [0, 256], sizes = [8, 128], strides = [1, 1]} : vector<8x512xf32> to vector<8x128xf32>
    %105 = math.tanh %104 : vector<8x128xf32>
    %106 = vector.extract_strided_slice %87 {offsets = [0, 384], sizes = [8, 128], strides = [1, 1]} : vector<8x512xf32> to vector<8x128xf32>
    %cst_43 = arith.constant 5.000000e-01 : f32
    %107 = vector.broadcast %cst_43 : f32 to vector<8x128xf32>
    %108 = arith.mulf %107, %106 : vector<8x128xf32>
    %109 = math.tanh %108 : vector<8x128xf32>
    %cst_44 = arith.constant 5.000000e-01 : f32
    %110 = vector.broadcast %cst_44 : f32 to vector<8x128xf32>
    %111 = arith.mulf %110, %109 : vector<8x128xf32>
    %cst_45 = arith.constant 5.000000e-01 : f32
    %112 = vector.broadcast %cst_45 : f32 to vector<8x128xf32>
    %113 = arith.addf %111, %112 : vector<8x128xf32>
    %114 = arith.mulf %103, %78 : vector<8x128xf32>
    %115 = arith.mulf %95, %105 : vector<8x128xf32>
    %116 = arith.addf %114, %115 : vector<8x128xf32>
    %117 = math.tanh %116 : vector<8x128xf32>
    %118 = arith.mulf %113, %117 : vector<8x128xf32>
    %c3_i32 = arith.constant 3 : i32
    %119 = arith.index_cast %c3_i32 : i32 to index
    %c0_46 = arith.constant 0 : index
    %c0_47 = arith.constant 0 : index
    %120 = vector.load %arg2[%119, %c0_46, %c0_47] : memref<8x8x512xf32, #tpu.memory_space<vmem>>, vector<1x8x512xf32>
    %121 = vector.shape_cast %120 : vector<1x8x512xf32> to vector<8x512xf32>
    %122 = arith.truncf %118 : vector<8x128xf32> to vector<8x128xbf16>
    %c0_48 = arith.constant 0 : index
    %c0_49 = arith.constant 0 : index
    %123 = vector.load %arg3[%c0_48, %c0_49] : memref<128x512xbf16, #tpu.memory_space<vmem>>, vector<128x512xbf16>
    %cst_50 = arith.constant dense<0.000000e+00> : vector<8x512xf32>
    %124 = tpu.matmul %122, %123, %cst_50 {dimension_numbers = #tpu.dot_dimension_numbers<[1], [0], [0], [1], [0, 0, 1, 1], [], []>} : vector<8x128xbf16>, vector<128x512xbf16>, vector<8x512xf32> -> vector<8x512xf32>
    %125 = arith.addf %121, %124 : vector<8x512xf32>
    %126 = vector.extract_strided_slice %125 {offsets = [0, 0], sizes = [8, 128], strides = [1, 1]} : vector<8x512xf32> to vector<8x128xf32>
    %cst_51 = arith.constant 5.000000e-01 : f32
    %127 = vector.broadcast %cst_51 : f32 to vector<8x128xf32>
    %128 = arith.mulf %127, %126 : vector<8x128xf32>
    %129 = math.tanh %128 : vector<8x128xf32>
    %cst_52 = arith.constant 5.000000e-01 : f32
    %130 = vector.broadcast %cst_52 : f32 to vector<8x128xf32>
    %131 = arith.mulf %130, %129 : vector<8x128xf32>
    %cst_53 = arith.constant 5.000000e-01 : f32
    %132 = vector.broadcast %cst_53 : f32 to vector<8x128xf32>
    %133 = arith.addf %131, %132 : vector<8x128xf32>
    %134 = vector.extract_strided_slice %125 {offsets = [0, 128], sizes = [8, 128], strides = [1, 1]} : vector<8x512xf32> to vector<8x128xf32>
    %cst_54 = arith.constant 5.000000e-01 : f32
    %135 = vector.broadcast %cst_54 : f32 to vector<8x128xf32>
    %136 = arith.mulf %135, %134 : vector<8x128xf32>
    %137 = math.tanh %136 : vector<8x128xf32>
    %cst_55 = arith.constant 5.000000e-01 : f32
    %138 = vector.broadcast %cst_55 : f32 to vector<8x128xf32>
    %139 = arith.mulf %138, %137 : vector<8x128xf32>
    %cst_56 = arith.constant 5.000000e-01 : f32
    %140 = vector.broadcast %cst_56 : f32 to vector<8x128xf32>
    %141 = arith.addf %139, %140 : vector<8x128xf32>
    %142 = vector.extract_strided_slice %125 {offsets = [0, 256], sizes = [8, 128], strides = [1, 1]} : vector<8x512xf32> to vector<8x128xf32>
    %143 = math.tanh %142 : vector<8x128xf32>
    %144 = vector.extract_strided_slice %125 {offsets = [0, 384], sizes = [8, 128], strides = [1, 1]} : vector<8x512xf32> to vector<8x128xf32>
    %cst_57 = arith.constant 5.000000e-01 : f32
    %145 = vector.broadcast %cst_57 : f32 to vector<8x128xf32>
    %146 = arith.mulf %145, %144 : vector<8x128xf32>
    %147 = math.tanh %146 : vector<8x128xf32>
    %cst_58 = arith.constant 5.000000e-01 : f32
    %148 = vector.broadcast %cst_58 : f32 to vector<8x128xf32>
    %149 = arith.mulf %148, %147 : vector<8x128xf32>
    %cst_59 = arith.constant 5.000000e-01 : f32
    %150 = vector.broadcast %cst_59 : f32 to vector<8x128xf32>
    %151 = arith.addf %149, %150 : vector<8x128xf32>
    %152 = arith.mulf %141, %116 : vector<8x128xf32>
    %153 = arith.mulf %133, %143 : vector<8x128xf32>
    %154 = arith.addf %152, %153 : vector<8x128xf32>
    %155 = math.tanh %154 : vector<8x128xf32>
    %156 = arith.mulf %151, %155 : vector<8x128xf32>
    %c4_i32 = arith.constant 4 : i32
    %157 = arith.index_cast %c4_i32 : i32 to index
    %c0_60 = arith.constant 0 : index
    %c0_61 = arith.constant 0 : index
    %158 = vector.load %arg2[%157, %c0_60, %c0_61] : memref<8x8x512xf32, #tpu.memory_space<vmem>>, vector<1x8x512xf32>
    %159 = vector.shape_cast %158 : vector<1x8x512xf32> to vector<8x512xf32>
    %160 = arith.truncf %156 : vector<8x128xf32> to vector<8x128xbf16>
    %c0_62 = arith.constant 0 : index
    %c0_63 = arith.constant 0 : index
    %161 = vector.load %arg3[%c0_62, %c0_63] : memref<128x512xbf16, #tpu.memory_space<vmem>>, vector<128x512xbf16>
    %cst_64 = arith.constant dense<0.000000e+00> : vector<8x512xf32>
    %162 = tpu.matmul %160, %161, %cst_64 {dimension_numbers = #tpu.dot_dimension_numbers<[1], [0], [0], [1], [0, 0, 1, 1], [], []>} : vector<8x128xbf16>, vector<128x512xbf16>, vector<8x512xf32> -> vector<8x512xf32>
    %163 = arith.addf %159, %162 : vector<8x512xf32>
    %164 = vector.extract_strided_slice %163 {offsets = [0, 0], sizes = [8, 128], strides = [1, 1]} : vector<8x512xf32> to vector<8x128xf32>
    %cst_65 = arith.constant 5.000000e-01 : f32
    %165 = vector.broadcast %cst_65 : f32 to vector<8x128xf32>
    %166 = arith.mulf %165, %164 : vector<8x128xf32>
    %167 = math.tanh %166 : vector<8x128xf32>
    %cst_66 = arith.constant 5.000000e-01 : f32
    %168 = vector.broadcast %cst_66 : f32 to vector<8x128xf32>
    %169 = arith.mulf %168, %167 : vector<8x128xf32>
    %cst_67 = arith.constant 5.000000e-01 : f32
    %170 = vector.broadcast %cst_67 : f32 to vector<8x128xf32>
    %171 = arith.addf %169, %170 : vector<8x128xf32>
    %172 = vector.extract_strided_slice %163 {offsets = [0, 128], sizes = [8, 128], strides = [1, 1]} : vector<8x512xf32> to vector<8x128xf32>
    %cst_68 = arith.constant 5.000000e-01 : f32
    %173 = vector.broadcast %cst_68 : f32 to vector<8x128xf32>
    %174 = arith.mulf %173, %172 : vector<8x128xf32>
    %175 = math.tanh %174 : vector<8x128xf32>
    %cst_69 = arith.constant 5.000000e-01 : f32
    %176 = vector.broadcast %cst_69 : f32 to vector<8x128xf32>
    %177 = arith.mulf %176, %175 : vector<8x128xf32>
    %cst_70 = arith.constant 5.000000e-01 : f32
    %178 = vector.broadcast %cst_70 : f32 to vector<8x128xf32>
    %179 = arith.addf %177, %178 : vector<8x128xf32>
    %180 = vector.extract_strided_slice %163 {offsets = [0, 256], sizes = [8, 128], strides = [1, 1]} : vector<8x512xf32> to vector<8x128xf32>
    %181 = math.tanh %180 : vector<8x128xf32>
    %182 = vector.extract_strided_slice %163 {offsets = [0, 384], sizes = [8, 128], strides = [1, 1]} : vector<8x512xf32> to vector<8x128xf32>
    %cst_71 = arith.constant 5.000000e-01 : f32
    %183 = vector.broadcast %cst_71 : f32 to vector<8x128xf32>
    %184 = arith.mulf %183, %182 : vector<8x128xf32>
    %185 = math.tanh %184 : vector<8x128xf32>
    %cst_72 = arith.constant 5.000000e-01 : f32
    %186 = vector.broadcast %cst_72 : f32 to vector<8x128xf32>
    %187 = arith.mulf %186, %185 : vector<8x128xf32>
    %cst_73 = arith.constant 5.000000e-01 : f32
    %188 = vector.broadcast %cst_73 : f32 to vector<8x128xf32>
    %189 = arith.addf %187, %188 : vector<8x128xf32>
    %190 = arith.mulf %179, %154 : vector<8x128xf32>
    %191 = arith.mulf %171, %181 : vector<8x128xf32>
    %192 = arith.addf %190, %191 : vector<8x128xf32>
    %193 = math.tanh %192 : vector<8x128xf32>
    %194 = arith.mulf %189, %193 : vector<8x128xf32>
    %c5_i32 = arith.constant 5 : i32
    %195 = arith.index_cast %c5_i32 : i32 to index
    %c0_74 = arith.constant 0 : index
    %c0_75 = arith.constant 0 : index
    %196 = vector.load %arg2[%195, %c0_74, %c0_75] : memref<8x8x512xf32, #tpu.memory_space<vmem>>, vector<1x8x512xf32>
    %197 = vector.shape_cast %196 : vector<1x8x512xf32> to vector<8x512xf32>
    %198 = arith.truncf %194 : vector<8x128xf32> to vector<8x128xbf16>
    %c0_76 = arith.constant 0 : index
    %c0_77 = arith.constant 0 : index
    %199 = vector.load %arg3[%c0_76, %c0_77] : memref<128x512xbf16, #tpu.memory_space<vmem>>, vector<128x512xbf16>
    %cst_78 = arith.constant dense<0.000000e+00> : vector<8x512xf32>
    %200 = tpu.matmul %198, %199, %cst_78 {dimension_numbers = #tpu.dot_dimension_numbers<[1], [0], [0], [1], [0, 0, 1, 1], [], []>} : vector<8x128xbf16>, vector<128x512xbf16>, vector<8x512xf32> -> vector<8x512xf32>
    %201 = arith.addf %197, %200 : vector<8x512xf32>
    %202 = vector.extract_strided_slice %201 {offsets = [0, 0], sizes = [8, 128], strides = [1, 1]} : vector<8x512xf32> to vector<8x128xf32>
    %cst_79 = arith.constant 5.000000e-01 : f32
    %203 = vector.broadcast %cst_79 : f32 to vector<8x128xf32>
    %204 = arith.mulf %203, %202 : vector<8x128xf32>
    %205 = math.tanh %204 : vector<8x128xf32>
    %cst_80 = arith.constant 5.000000e-01 : f32
    %206 = vector.broadcast %cst_80 : f32 to vector<8x128xf32>
    %207 = arith.mulf %206, %205 : vector<8x128xf32>
    %cst_81 = arith.constant 5.000000e-01 : f32
    %208 = vector.broadcast %cst_81 : f32 to vector<8x128xf32>
    %209 = arith.addf %207, %208 : vector<8x128xf32>
    %210 = vector.extract_strided_slice %201 {offsets = [0, 128], sizes = [8, 128], strides = [1, 1]} : vector<8x512xf32> to vector<8x128xf32>
    %cst_82 = arith.constant 5.000000e-01 : f32
    %211 = vector.broadcast %cst_82 : f32 to vector<8x128xf32>
    %212 = arith.mulf %211, %210 : vector<8x128xf32>
    %213 = math.tanh %212 : vector<8x128xf32>
    %cst_83 = arith.constant 5.000000e-01 : f32
    %214 = vector.broadcast %cst_83 : f32 to vector<8x128xf32>
    %215 = arith.mulf %214, %213 : vector<8x128xf32>
    %cst_84 = arith.constant 5.000000e-01 : f32
    %216 = vector.broadcast %cst_84 : f32 to vector<8x128xf32>
    %217 = arith.addf %215, %216 : vector<8x128xf32>
    %218 = vector.extract_strided_slice %201 {offsets = [0, 256], sizes = [8, 128], strides = [1, 1]} : vector<8x512xf32> to vector<8x128xf32>
    %219 = math.tanh %218 : vector<8x128xf32>
    %220 = vector.extract_strided_slice %201 {offsets = [0, 384], sizes = [8, 128], strides = [1, 1]} : vector<8x512xf32> to vector<8x128xf32>
    %cst_85 = arith.constant 5.000000e-01 : f32
    %221 = vector.broadcast %cst_85 : f32 to vector<8x128xf32>
    %222 = arith.mulf %221, %220 : vector<8x128xf32>
    %223 = math.tanh %222 : vector<8x128xf32>
    %cst_86 = arith.constant 5.000000e-01 : f32
    %224 = vector.broadcast %cst_86 : f32 to vector<8x128xf32>
    %225 = arith.mulf %224, %223 : vector<8x128xf32>
    %cst_87 = arith.constant 5.000000e-01 : f32
    %226 = vector.broadcast %cst_87 : f32 to vector<8x128xf32>
    %227 = arith.addf %225, %226 : vector<8x128xf32>
    %228 = arith.mulf %217, %192 : vector<8x128xf32>
    %229 = arith.mulf %209, %219 : vector<8x128xf32>
    %230 = arith.addf %228, %229 : vector<8x128xf32>
    %231 = math.tanh %230 : vector<8x128xf32>
    %232 = arith.mulf %227, %231 : vector<8x128xf32>
    %c6_i32 = arith.constant 6 : i32
    %233 = arith.index_cast %c6_i32 : i32 to index
    %c0_88 = arith.constant 0 : index
    %c0_89 = arith.constant 0 : index
    %234 = vector.load %arg2[%233, %c0_88, %c0_89] : memref<8x8x512xf32, #tpu.memory_space<vmem>>, vector<1x8x512xf32>
    %235 = vector.shape_cast %234 : vector<1x8x512xf32> to vector<8x512xf32>
    %236 = arith.truncf %232 : vector<8x128xf32> to vector<8x128xbf16>
    %c0_90 = arith.constant 0 : index
    %c0_91 = arith.constant 0 : index
    %237 = vector.load %arg3[%c0_90, %c0_91] : memref<128x512xbf16, #tpu.memory_space<vmem>>, vector<128x512xbf16>
    %cst_92 = arith.constant dense<0.000000e+00> : vector<8x512xf32>
    %238 = tpu.matmul %236, %237, %cst_92 {dimension_numbers = #tpu.dot_dimension_numbers<[1], [0], [0], [1], [0, 0, 1, 1], [], []>} : vector<8x128xbf16>, vector<128x512xbf16>, vector<8x512xf32> -> vector<8x512xf32>
    %239 = arith.addf %235, %238 : vector<8x512xf32>
    %240 = vector.extract_strided_slice %239 {offsets = [0, 0], sizes = [8, 128], strides = [1, 1]} : vector<8x512xf32> to vector<8x128xf32>
    %cst_93 = arith.constant 5.000000e-01 : f32
    %241 = vector.broadcast %cst_93 : f32 to vector<8x128xf32>
    %242 = arith.mulf %241, %240 : vector<8x128xf32>
    %243 = math.tanh %242 : vector<8x128xf32>
    %cst_94 = arith.constant 5.000000e-01 : f32
    %244 = vector.broadcast %cst_94 : f32 to vector<8x128xf32>
    %245 = arith.mulf %244, %243 : vector<8x128xf32>
    %cst_95 = arith.constant 5.000000e-01 : f32
    %246 = vector.broadcast %cst_95 : f32 to vector<8x128xf32>
    %247 = arith.addf %245, %246 : vector<8x128xf32>
    %248 = vector.extract_strided_slice %239 {offsets = [0, 128], sizes = [8, 128], strides = [1, 1]} : vector<8x512xf32> to vector<8x128xf32>
    %cst_96 = arith.constant 5.000000e-01 : f32
    %249 = vector.broadcast %cst_96 : f32 to vector<8x128xf32>
    %250 = arith.mulf %249, %248 : vector<8x128xf32>
    %251 = math.tanh %250 : vector<8x128xf32>
    %cst_97 = arith.constant 5.000000e-01 : f32
    %252 = vector.broadcast %cst_97 : f32 to vector<8x128xf32>
    %253 = arith.mulf %252, %251 : vector<8x128xf32>
    %cst_98 = arith.constant 5.000000e-01 : f32
    %254 = vector.broadcast %cst_98 : f32 to vector<8x128xf32>
    %255 = arith.addf %253, %254 : vector<8x128xf32>
    %256 = vector.extract_strided_slice %239 {offsets = [0, 256], sizes = [8, 128], strides = [1, 1]} : vector<8x512xf32> to vector<8x128xf32>
    %257 = math.tanh %256 : vector<8x128xf32>
    %258 = vector.extract_strided_slice %239 {offsets = [0, 384], sizes = [8, 128], strides = [1, 1]} : vector<8x512xf32> to vector<8x128xf32>
    %cst_99 = arith.constant 5.000000e-01 : f32
    %259 = vector.broadcast %cst_99 : f32 to vector<8x128xf32>
    %260 = arith.mulf %259, %258 : vector<8x128xf32>
    %261 = math.tanh %260 : vector<8x128xf32>
    %cst_100 = arith.constant 5.000000e-01 : f32
    %262 = vector.broadcast %cst_100 : f32 to vector<8x128xf32>
    %263 = arith.mulf %262, %261 : vector<8x128xf32>
    %cst_101 = arith.constant 5.000000e-01 : f32
    %264 = vector.broadcast %cst_101 : f32 to vector<8x128xf32>
    %265 = arith.addf %263, %264 : vector<8x128xf32>
    %266 = arith.mulf %255, %230 : vector<8x128xf32>
    %267 = arith.mulf %247, %257 : vector<8x128xf32>
    %268 = arith.addf %266, %267 : vector<8x128xf32>
    %269 = math.tanh %268 : vector<8x128xf32>
    %270 = arith.mulf %265, %269 : vector<8x128xf32>
    %c7_i32 = arith.constant 7 : i32
    %271 = arith.index_cast %c7_i32 : i32 to index
    %c0_102 = arith.constant 0 : index
    %c0_103 = arith.constant 0 : index
    %272 = vector.load %arg2[%271, %c0_102, %c0_103] : memref<8x8x512xf32, #tpu.memory_space<vmem>>, vector<1x8x512xf32>
    %273 = vector.shape_cast %272 : vector<1x8x512xf32> to vector<8x512xf32>
    %274 = arith.truncf %270 : vector<8x128xf32> to vector<8x128xbf16>
    %c0_104 = arith.constant 0 : index
    %c0_105 = arith.constant 0 : index
    %275 = vector.load %arg3[%c0_104, %c0_105] : memref<128x512xbf16, #tpu.memory_space<vmem>>, vector<128x512xbf16>
    %cst_106 = arith.constant dense<0.000000e+00> : vector<8x512xf32>
    %276 = tpu.matmul %274, %275, %cst_106 {dimension_numbers = #tpu.dot_dimension_numbers<[1], [0], [0], [1], [0, 0, 1, 1], [], []>} : vector<8x128xbf16>, vector<128x512xbf16>, vector<8x512xf32> -> vector<8x512xf32>
    %277 = arith.addf %273, %276 : vector<8x512xf32>
    %278 = vector.extract_strided_slice %277 {offsets = [0, 0], sizes = [8, 128], strides = [1, 1]} : vector<8x512xf32> to vector<8x128xf32>
    %cst_107 = arith.constant 5.000000e-01 : f32
    %279 = vector.broadcast %cst_107 : f32 to vector<8x128xf32>
    %280 = arith.mulf %279, %278 : vector<8x128xf32>
    %281 = math.tanh %280 : vector<8x128xf32>
    %cst_108 = arith.constant 5.000000e-01 : f32
    %282 = vector.broadcast %cst_108 : f32 to vector<8x128xf32>
    %283 = arith.mulf %282, %281 : vector<8x128xf32>
    %cst_109 = arith.constant 5.000000e-01 : f32
    %284 = vector.broadcast %cst_109 : f32 to vector<8x128xf32>
    %285 = arith.addf %283, %284 : vector<8x128xf32>
    %286 = vector.extract_strided_slice %277 {offsets = [0, 128], sizes = [8, 128], strides = [1, 1]} : vector<8x512xf32> to vector<8x128xf32>
    %cst_110 = arith.constant 5.000000e-01 : f32
    %287 = vector.broadcast %cst_110 : f32 to vector<8x128xf32>
    %288 = arith.mulf %287, %286 : vector<8x128xf32>
    %289 = math.tanh %288 : vector<8x128xf32>
    %cst_111 = arith.constant 5.000000e-01 : f32
    %290 = vector.broadcast %cst_111 : f32 to vector<8x128xf32>
    %291 = arith.mulf %290, %289 : vector<8x128xf32>
    %cst_112 = arith.constant 5.000000e-01 : f32
    %292 = vector.broadcast %cst_112 : f32 to vector<8x128xf32>
    %293 = arith.addf %291, %292 : vector<8x128xf32>
    %294 = vector.extract_strided_slice %277 {offsets = [0, 256], sizes = [8, 128], strides = [1, 1]} : vector<8x512xf32> to vector<8x128xf32>
    %295 = math.tanh %294 : vector<8x128xf32>
    %296 = vector.extract_strided_slice %277 {offsets = [0, 384], sizes = [8, 128], strides = [1, 1]} : vector<8x512xf32> to vector<8x128xf32>
    %cst_113 = arith.constant 5.000000e-01 : f32
    %297 = vector.broadcast %cst_113 : f32 to vector<8x128xf32>
    %298 = arith.mulf %297, %296 : vector<8x128xf32>
    %299 = math.tanh %298 : vector<8x128xf32>
    %cst_114 = arith.constant 5.000000e-01 : f32
    %300 = vector.broadcast %cst_114 : f32 to vector<8x128xf32>
    %301 = arith.mulf %300, %299 : vector<8x128xf32>
    %cst_115 = arith.constant 5.000000e-01 : f32
    %302 = vector.broadcast %cst_115 : f32 to vector<8x128xf32>
    %303 = arith.addf %301, %302 : vector<8x128xf32>
    %304 = arith.mulf %293, %268 : vector<8x128xf32>
    %305 = arith.mulf %285, %295 : vector<8x128xf32>
    %306 = arith.addf %304, %305 : vector<8x128xf32>
    %307 = math.tanh %306 : vector<8x128xf32>
    %308 = arith.mulf %303, %307 : vector<8x128xf32>
    %c8_i32 = arith.constant 8 : i32
    %c0_116 = arith.constant 0 : index
    %c0_117 = arith.constant 0 : index
    %309 = vector.load %arg6[%c0_116, %c0_117] : memref<8x128xf32, #tpu.memory_space<vmem>>, vector<8x128xf32>
    tpu.vector_store %arg6[%c0_116, %c0_117], %308 {strides = array<i32>} : memref<8x128xf32, #tpu.memory_space<vmem>>, vector<8x128xf32>,
    %c0_118 = arith.constant 0 : index
    %c0_119 = arith.constant 0 : index
    %310 = vector.load %arg7[%c0_118, %c0_119] : memref<8x128xf32, #tpu.memory_space<vmem>>, vector<8x128xf32>
    tpu.vector_store %arg7[%c0_118, %c0_119], %306 {strides = array<i32>} : memref<8x128xf32, #tpu.memory_space<vmem>>, vector<8x128xf32>,
    %c0_i32_120 = arith.constant 0 : i32
    %311 = arith.cmpi eq, %arg1, %c0_i32_120 : i32
    %312 = arith.extui %311 : i1 to i32
    %c0_i32_121 = arith.constant 0 : i32
    %313 = arith.cmpi ne, %312, %c0_i32_121 : i32
    scf.if %313 {
      %c0_122 = arith.constant 0 : index
      %c0_123 = arith.constant 0 : index
      %314 = vector.load %arg4[%c0_122, %c0_123] : memref<8x128xf32, #tpu.memory_space<vmem>>, vector<8x128xf32>
      tpu.vector_store %arg4[%c0_122, %c0_123], %308 {strides = array<i32>} : memref<8x128xf32, #tpu.memory_space<vmem>>, vector<8x128xf32>,
      %c0_124 = arith.constant 0 : index
      %c0_125 = arith.constant 0 : index
      %315 = vector.load %arg5[%c0_124, %c0_125] : memref<8x128xf32, #tpu.memory_space<vmem>>, vector<8x128xf32>
      tpu.vector_store %arg5[%c0_124, %c0_125], %306 {strides = array<i32>} : memref<8x128xf32, #tpu.memory_space<vmem>>, vector<8x128xf32>,
    } else {
    }
    return
  }
  func.func @transform_0(%arg0: i32, %arg1: i32) -> (i32, i32, i32) {
    %c0_i32 = arith.constant 0 : i32
    %c0_i32_0 = arith.constant 0 : i32
    return %arg1, %arg0, %c0_i32 : i32, i32, i32
  }
  func.func @transform_1(%arg0: i32, %arg1: i32) -> (i32, i32) {
    %c0_i32 = arith.constant 0 : i32
    %c0_i32_0 = arith.constant 0 : i32
    %c0_i32_1 = arith.constant 0 : i32
    return %c0_i32, %c0_i32_0 : i32, i32
  }
  func.func @transform_2(%arg0: i32, %arg1: i32) -> (i32, i32) {
    %c0_i32 = arith.constant 0 : i32
    %c0_i32_0 = arith.constant 0 : i32
    return %arg0, %c0_i32 : i32, i32
  }
  func.func @transform_3(%arg0: i32, %arg1: i32) -> (i32, i32) {
    %c0_i32 = arith.constant 0 : i32
    %c0_i32_0 = arith.constant 0 : i32
    return %arg0, %c0_i32 : i32, i32
  }
}

</mosaic_0001>

<llo_original>
// kernel: tpu_custom_call.1
$region0: #{tpu_custom_call.1}
  #allocation0 [shape = 'u32[]', space=smem, size = 0x4, offset = 0x4, fixed_abs, tag = 'smem constant byte address 0x4 - core index']
  #allocation1 [shape = 'u32[72,128]{1,0:T(1,128)}', space=vmem, size = 0x9000, scoped, tag = 'internal scratch']
  #allocation2 [shape = 'f32[8,128]{1,0:T(8,128)}', space=vmem, size = 0x1000, scoped, tag = 'scratch operand']
  #allocation3 [shape = 'f32[8,128]{1,0:T(8,128)}', space=vmem, size = 0x1000, scoped, tag = 'scratch operand']
  %s0 = inlined_call_operand.hbm [shape: f32[8,8,512], index: 0, kind: input, shape index: {}]
  %s1 = inlined_call_operand.hbm [shape: bf16[128,512], index: 1, kind: input, shape index: {}]
  %s2 = inlined_call_operand.hbm [shape: f32[8,128], index: 2, kind: output, shape index: {0}]
  %s3 = inlined_call_operand.hbm [shape: f32[8,128], index: 3, kind: output, shape index: {1}]
  %4 = xla_tuple %s2, %s3
  %s5 = sld [smem:[#allocation0]]
  $region42: #{tpu_custom_call.1} parent=0
    _
  %s7 = ssub.s32 1, %s5
  %s8 = scalar_select 0, %s7, %s5
  $region1: #{tpu_custom_call.1} parent=0
    #allocation4 [shape = 'u8[131072]{0}', space=vmem, size = 0x20000, scoped, tag = 'input window, operand 0, single buffered']
    #allocation5 [shape = 's32[1]{0}', space=sflag, size = 0x4, scoped, tag = 'scoped memory for tpu_custom_call.1']
    #allocation6 [shape = 's32[1]{0}', space=sflag, size = 0x4, scoped, tag = 'scoped memory for tpu_custom_call.1']
    #allocation7 [shape = 'u8[131072]{0}', space=vmem, size = 0x20000, scoped, tag = 'input window, operand 1, single buffered']
    #allocation8 [shape = 's32[1]{0}', space=sflag, size = 0x4, scoped, tag = 'scoped memory for tpu_custom_call.1']
    #allocation9 [shape = 'u8[4096]{0}', space=vmem, size = 0x1000, scoped, tag = 'output window, operand 0, single buffered']
    #allocation10 [shape = 'u8[4096]{0}', space=vmem, size = 0x1000, scoped, tag = 'output window, operand 1, single buffered']
    #allocation11 [shape = 's32[1]{0}', space=sflag, size = 0x4, scoped, tag = 'scoped memory for tpu_custom_call.1']
    %9 = vsyncpa [#allocation5], 0
    %10 = vsyncpa [#allocation8], 0
    %11 = vsyncpa [#allocation6], 0
    %12 = vsyncpa [#allocation11], 0
    // Predicated region
    $region2: #{tpu_custom_call.1} parent=1 // pred_check
      _
    $region3: #{tpu_custom_call.1} parent=1 // pred_check_branch
      %14 = sbr.rel (0) target = $region5
    $region4: #{tpu_custom_call.1} parent=1 // pred_region
      %16 = vsyncadd [#allocation5], 0
      %s17 = sshll.u32 %s0, 4
      %s18 = int_to_ptr.hbm [resolvable:$true] %s17
      %s19 = sshll.u32 [#allocation4], 4
      %s20 = int_to_ptr.vmem [resolvable:$true] %s19
      %25 = dma.hbm_to_vmem [thread:$0]  %s18, 4096, %s20, [#allocation5], 512, 512, 32
    $region5: #{tpu_custom_call.1} parent=1 // pred_fallthru
      _
    // Predicated region
    $region6: #{tpu_custom_call.1} parent=1 // pred_check
      _
    $region7: #{tpu_custom_call.1} parent=1 // pred_check_branch
      %27 = sbr.rel (0) target = $region9
    $region8: #{tpu_custom_call.1} parent=1 // pred_region
      %29 = vsyncadd [#allocation8], 0
      %s30 = sshll.u32 %s1, 4
      %s31 = int_to_ptr.hbm [resolvable:$true] %s30
      %s32 = sshll.u32 [#allocation7], 4
      %s33 = int_to_ptr.vmem [resolvable:$true] %s32
      %38 = dma.hbm_to_vmem [thread:$0]  %s31, 4096, %s33, [#allocation8], 256, 256, 16
    $region9: #{tpu_custom_call.1} parent=1 // pred_fallthru
      _
    // Predicated region
    $region10: #{tpu_custom_call.1} parent=1 // pred_check
      _
    $region11: #{tpu_custom_call.1} parent=1 // pred_check_branch
      %40 = sbr.rel (0) target = $region13
    $region12: #{tpu_custom_call.1} parent=1 // pred_region
      %42 = dma.done [#allocation5], 4096
    $region13: #{tpu_custom_call.1} parent=1 // pred_fallthru
      _
    // Predicated region
    $region14: #{tpu_custom_call.1} parent=1 // pred_check
      _
    $region15: #{tpu_custom_call.1} parent=1 // pred_check_branch
      %44 = sbr.rel (0) target = $region17
    $region16: #{tpu_custom_call.1} parent=1 // pred_region
      %46 = dma.done [#allocation8], 4096
    $region17: #{tpu_custom_call.1} parent=1 // pred_fallthru
      _
    %p47 = scmp.eq.s32.totalorder 0, 0
    // Predicated region
    $region18: #{tpu_custom_call.1} parent=1 // pred_check
      %p48 = pneg %p47
    $region19: #{tpu_custom_call.1} parent=1 // pred_check_branch
      %50 = sbr.rel (%p48) target = $region21
    $region20: #{tpu_custom_call.1} parent=1 // pred_region
      %51 = vst [vmem:[#allocation2] sm:$0xff] 0.0
      %52 = vst [vmem:[#allocation3] sm:$0xff] 0.0
    $region21: #{tpu_custom_call.1} parent=1 // pred_fallthru
      _
    %v53 = vld [vmem:[#allocation2] sm:$0xff]
    %v54 = vld [vmem:[#allocation3] sm:$0xff]
    %v55 = vld [vmem:[#allocation4] sm:$0xff]
    %v56 = vld [vmem:[#allocation4 + $0x8] sm:$0xff]
    %v57 = vld [vmem:[#allocation4 + $0x10] sm:$0xff]
    %v58 = vld [vmem:[#allocation4 + $0x18] sm:$0xff]
    %v59 = vpack.c.bf16 %v53, %v53
    %v60 = vld [vmem:[#allocation7] sm:$0xff]
    %v61 = vld [vmem:[#allocation7 + $0x8] sm:$0xff]
    %v62 = vld [vmem:[#allocation7 + $0x10] sm:$0xff]
    %v63 = vld [vmem:[#allocation7 + $0x18] sm:$0xff]
    %v64 = vld [vmem:[#allocation7 + $0x20] sm:$0xff]
    %v65 = vld [vmem:[#allocation7 + $0x28] sm:$0xff]
    %v66 = vld [vmem:[#allocation7 + $0x30] sm:$0xff]
    %v67 = vld [vmem:[#allocation7 + $0x38] sm:$0xff]
    %v68 = vld [vmem:[#allocation7 + $0x40] sm:$0xff]
    %v69 = vld [vmem:[#allocation7 + $0x48] sm:$0xff]
    %v70 = vld [vmem:[#allocation7 + $0x50] sm:$0xff]
    %v71 = vld [vmem:[#allocation7 + $0x58] sm:$0xff]
    %v72 = vld [vmem:[#allocation7 + $0x60] sm:$0xff]
    %v73 = vld [vmem:[#allocation7 + $0x68] sm:$0xff]
    %v74 = vld [vmem:[#allocation7 + $0x70] sm:$0xff]
    %v75 = vld [vmem:[#allocation7 + $0x78] sm:$0xff]
    %v76 = vld [vmem:[#allocation7 + $0x80] sm:$0xff]
    %v77 = vld [vmem:[#allocation7 + $0x88] sm:$0xff]
    %v78 = vld [vmem:[#allocation7 + $0x90] sm:$0xff]
    %v79 = vld [vmem:[#allocation7 + $0x98] sm:$0xff]
    %v80 = vld [vmem:[#allocation7 + $0xa0] sm:$0xff]
    %v81 = vld [vmem:[#allocation7 + $0xa8] sm:$0xff]
    %v82 = vld [vmem:[#allocation7 + $0xb0] sm:$0xff]
    %v83 = vld [vmem:[#allocation7 + $0xb8] sm:$0xff]
    %v84 = vld [vmem:[#allocation7 + $0xc0] sm:$0xff]
    %v85 = vld [vmem:[#allocation7 + $0xc8] sm:$0xff]
    %v86 = vld [vmem:[#allocation7 + $0xd0] sm:$0xff]
    %v87 = vld [vmem:[#allocation7 + $0xd8] sm:$0xff]
    %v88 = vld [vmem:[#allocation7 + $0xe0] sm:$0xff]
    %v89 = vld [vmem:[#allocation7 + $0xe8] sm:$0xff]
    %v90 = vld [vmem:[#allocation7 + $0xf0] sm:$0xff]
    %v91 = vld [vmem:[#allocation7 + $0xf8] sm:$0xff]
    %v124 = vunpack.c.l.b16 %v60
    %v125 = vunpack.c.h.b16 %v60
    %v126 = vunpack.c.l.b16 %v61
    %v127 = vunpack.c.h.b16 %v61
    %v128 = vunpack.c.l.b16 %v62
    %v129 = vunpack.c.h.b16 %v62
    %v130 = vunpack.c.l.b16 %v63
    %v131 = vunpack.c.h.b16 %v63
    %v132 = vunpack.c.l.b16 %v64
    %v133 = vunpack.c.h.b16 %v64
    %v134 = vunpack.c.l.b16 %v65
    %v135 = vunpack.c.h.b16 %v65
    %v136 = vunpack.c.l.b16 %v66
    %v137 = vunpack.c.h.b16 %v66
    %v138 = vunpack.c.l.b16 %v67
    %v139 = vunpack.c.h.b16 %v67
    %v140 = vunpack.c.l.b16 %v68
    %v141 = vunpack.c.h.b16 %v68
    %v142 = vunpack.c.l.b16 %v69
    %v143 = vunpack.c.h.b16 %v69
    %v144 = vunpack.c.l.b16 %v70
    %v145 = vunpack.c.h.b16 %v70
    %v146 = vunpack.c.l.b16 %v71
    %v147 = vunpack.c.h.b16 %v71
    %v148 = vunpack.c.l.b16 %v72
    %v149 = vunpack.c.h.b16 %v72
    %v150 = vunpack.c.l.b16 %v73
    %v151 = vunpack.c.h.b16 %v73
    %v152 = vunpack.c.l.b16 %v74
    %v153 = vunpack.c.h.b16 %v74
    %v154 = vunpack.c.l.b16 %v75
    %v155 = vunpack.c.h.b16 %v75
    %v156 = vunpack.c.l.b16 %v76
    %v157 = vunpack.c.h.b16 %v76
    %v158 = vunpack.c.l.b16 %v77
    %v159 = vunpack.c.h.b16 %v77
    %v160 = vunpack.c.l.b16 %v78
    %v161 = vunpack.c.h.b16 %v78
    %v162 = vunpack.c.l.b16 %v79
    %v163 = vunpack.c.h.b16 %v79
    %v164 = vunpack.c.l.b16 %v80
    %v165 = vunpack.c.h.b16 %v80
    %v166 = vunpack.c.l.b16 %v81
    %v167 = vunpack.c.h.b16 %v81
    %v168 = vunpack.c.l.b16 %v82
    %v169 = vunpack.c.h.b16 %v82
    %v170 = vunpack.c.l.b16 %v83
    %v171 = vunpack.c.h.b16 %v83
    %v172 = vunpack.c.l.b16 %v84
    %v173 = vunpack.c.h.b16 %v84
    %v174 = vunpack.c.l.b16 %v85
    %v175 = vunpack.c.h.b16 %v85
    %v176 = vunpack.c.l.b16 %v86
    %v177 = vunpack.c.h.b16 %v86
    %v178 = vunpack.c.l.b16 %v87
    %v179 = vunpack.c.h.b16 %v87
    %v180 = vunpack.c.l.b16 %v88
    %v181 = vunpack.c.h.b16 %v88
    %v182 = vunpack.c.l.b16 %v89
    %v183 = vunpack.c.h.b16 %v89
    %v184 = vunpack.c.l.b16 %v90
    %v185 = vunpack.c.h.b16 %v90
    %v186 = vunpack.c.l.b16 %v91
    %v187 = vunpack.c.h.b16 %v91
    %v188 = vpack.c.b16 %v128, %v124
    %v189 = vpack.c.b16 %v129, %v125
    %v190 = vpack.c.b16 %v130, %v126
    %v191 = vpack.c.b16 %v131, %v127
    %v192 = vpack.c.b16 %v136, %v132
    %v193 = vpack.c.b16 %v137, %v133
    %v194 = vpack.c.b16 %v138, %v134
    %v195 = vpack.c.b16 %v139, %v135
    %v196 = vpack.c.b16 %v144, %v140
    %v197 = vpack.c.b16 %v145, %v141
    %v198 = vpack.c.b16 %v146, %v142
    %v199 = vpack.c.b16 %v147, %v143
    %v200 = vpack.c.b16 %v152, %v148
    %v201 = vpack.c.b16 %v153, %v149
    %v202 = vpack.c.b16 %v154, %v150
    %v203 = vpack.c.b16 %v155, %v151
    %v204 = vpack.c.b16 %v160, %v156
    %v205 = vpack.c.b16 %v161, %v157
    %v206 = vpack.c.b16 %v162, %v158
    %v207 = vpack.c.b16 %v163, %v159
    %v208 = vpack.c.b16 %v168, %v164
    %v209 = vpack.c.b16 %v169, %v165
    %v210 = vpack.c.b16 %v170, %v166
    %v211 = vpack.c.b16 %v171, %v167
    %v212 = vpack.c.b16 %v176, %v172
    %v213 = vpack.c.b16 %v177, %v173
    %v214 = vpack.c.b16 %v178, %v174
    %v215 = vpack.c.b16 %v179, %v175
    %v216 = vpack.c.b16 %v184, %v180
    %v217 = vpack.c.b16 %v185, %v181
    %v218 = vpack.c.b16 %v186, %v182
    %v219 = vpack.c.b16 %v187, %v183
    %252 = vmatpush.bf16.msra.mxu0 %v216
    %253 = vmatpush.bf16.msra.mxu0 %v212
    %254 = vmatpush.bf16.msra.mxu0 %v208
    %255 = vmatpush.bf16.msra.mxu0 %v204
    %256 = vmatpush.bf16.msra.mxu0 %v200
    %257 = vmatpush.bf16.msra.mxu0 %v196
    %258 = vmatpush.bf16.msra.mxu0 %v192
    %259 = vmatpush.bf16.msra.mxu0 %v188
    %260 = vmatmul.bf16.gmra.mxu0 %v59
    %v261 = vpop.f32.mrf.mxu0
    %v262 = vadd.f32 0.0, %v261
    %v263 = vpop.f32.mrf.mxu0
    %264 = vdwg.mxu0
    %265 = vmatpush.bf16.msra.mxu0 %v217
    %266 = vmatpush.bf16.msra.mxu0 %v213
    %267 = vmatpush.bf16.msra.mxu0 %v209
    %268 = vmatpush.bf16.msra.mxu0 %v205
    %269 = vmatpush.bf16.msra.mxu0 %v201
    %270 = vmatpush.bf16.msra.mxu0 %v197
    %271 = vmatpush.bf16.msra.mxu0 %v193
    %272 = vmatpush.bf16.msra.mxu0 %v189
    %273 = vmatmul.bf16.gmra.mxu0 %v59
    %v274 = vpop.f32.mrf.mxu0
    %v275 = vadd.f32 0.0, %v274
    %v276 = vpop.f32.mrf.mxu0
    %277 = vdwg.mxu0
    %278 = vmatpush.bf16.msra.mxu0 %v218
    %279 = vmatpush.bf16.msra.mxu0 %v214
    %280 = vmatpush.bf16.msra.mxu0 %v210
    %281 = vmatpush.bf16.msra.mxu0 %v206
    %282 = vmatpush.bf16.msra.mxu0 %v202
    %283 = vmatpush.bf16.msra.mxu0 %v198
    %284 = vmatpush.bf16.msra.mxu0 %v194
    %285 = vmatpush.bf16.msra.mxu0 %v190
    %286 = vmatmul.bf16.gmra.mxu0 %v59
    %v287 = vpop.f32.mrf.mxu0
    %v288 = vadd.f32 0.0, %v287
    %v289 = vpop.f32.mrf.mxu0
    %290 = vdwg.mxu0
    %291 = vmatpush.bf16.msra.mxu0 %v219
    %292 = vmatpush.bf16.msra.mxu0 %v215
    %293 = vmatpush.bf16.msra.mxu0 %v211
    %294 = vmatpush.bf16.msra.mxu0 %v207
    %295 = vmatpush.bf16.msra.mxu0 %v203
    %296 = vmatpush.bf16.msra.mxu0 %v199
    %297 = vmatpush.bf16.msra.mxu0 %v195
    %298 = vmatpush.bf16.msra.mxu0 %v191
    %299 = vmatmul.bf16.gmra.mxu0 %v59
    %v300 = vpop.f32.mrf.mxu0
    %v301 = vadd.f32 0.0, %v300
    %v302 = vpop.f32.mrf.mxu0
    %303 = vdwg.mxu0
    %v304 = vadd.f32 %v55, %v262
    %v305 = vadd.f32 %v56, %v275
    %v306 = vadd.f32 %v57, %v288
    %v307 = vadd.f32 %v58, %v301
    %v308 = vmul.f32 %v304, 0.5
    %v309 = vtanh.pop %v308
    %v310 = vmul.f32 %v309, 0.5
    %v311 = vadd.f32 %v310, 0.5
    %v312 = vmul.f32 %v305, 0.5
    %v313 = vtanh.pop %v312
    %v314 = vmul.f32 %v313, 0.5
    %v315 = vadd.f32 %v314, 0.5
    %v316 = vtanh.pop %v306
    %v317 = vmul.f32 %v307, 0.5
    %v318 = vtanh.pop %v317
    %v319 = vmul.f32 %v318, 0.5
    %v320 = vadd.f32 %v319, 0.5
    %v321 = vmul.f32 %v315, %v54
    %v322 = vmul.f32 %v311, %v316
    %v323 = vadd.f32 %v321, %v322
    %v324 = vtanh.pop %v323
    %v325 = vmul.f32 %v320, %v324
    %s326 = scalar_lea.vmem [#allocation4], 32
    %v327 = vld [vmem:[%s326] sm:$0xff]
    %v328 = vld [vmem:[%s326 + $0x8] sm:$0xff]
    %v329 = vld [vmem:[%s326 + $0x10] sm:$0xff]
    %v330 = vld [vmem:[%s326 + $0x18] sm:$0xff]
    %v331 = vpack.c.bf16 %v325, %v325
    %332 = vmatpush.bf16.msra.mxu0 %v216
    %333 = vmatpush.bf16.msra.mxu0 %v212
    %334 = vmatpush.bf16.msra.mxu0 %v208
    %335 = vmatpush.bf16.msra.mxu0 %v204
    %336 = vmatpush.bf16.msra.mxu0 %v200
    %337 = vmatpush.bf16.msra.mxu0 %v196
    %338 = vmatpush.bf16.msra.mxu0 %v192
    %339 = vmatpush.bf16.msra.mxu0 %v188
    %340 = vmatmul.bf16.gmra.mxu0 %v331
    %v341 = vpop.f32.mrf.mxu0
    %v342 = vadd.f32 0.0, %v341
    %v343 = vpop.f32.mrf.mxu0
    %344 = vdwg.mxu0
    %345 = vmatpush.bf16.msra.mxu0 %v217
    %346 = vmatpush.bf16.msra.mxu0 %v213
    %347 = vmatpush.bf16.msra.mxu0 %v209
    %348 = vmatpush.bf16.msra.mxu0 %v205
    %349 = vmatpush.bf16.msra.mxu0 %v201
    %350 = vmatpush.bf16.msra.mxu0 %v197
    %351 = vmatpush.bf16.msra.mxu0 %v193
    %352 = vmatpush.bf16.msra.mxu0 %v189
    %353 = vmatmul.bf16.gmra.mxu0 %v331
    %v354 = vpop.f32.mrf.mxu0
    %v355 = vadd.f32 0.0, %v354
    %v356 = vpop.f32.mrf.mxu0
    %357 = vdwg.mxu0
    %358 = vmatpush.bf16.msra.mxu0 %v218
    %359 = vmatpush.bf16.msra.mxu0 %v214
    %360 = vmatpush.bf16.msra.mxu0 %v210
    %361 = vmatpush.bf16.msra.mxu0 %v206
    %362 = vmatpush.bf16.msra.mxu0 %v202
    %363 = vmatpush.bf16.msra.mxu0 %v198
    %364 = vmatpush.bf16.msra.mxu0 %v194
    %365 = vmatpush.bf16.msra.mxu0 %v190
    %366 = vmatmul.bf16.gmra.mxu0 %v331
    %v367 = vpop.f32.mrf.mxu0
    %v368 = vadd.f32 0.0, %v367
    %v369 = vpop.f32.mrf.mxu0
    %370 = vdwg.mxu0
    %371 = vmatpush.bf16.msra.mxu0 %v219
    %372 = vmatpush.bf16.msra.mxu0 %v215
    %373 = vmatpush.bf16.msra.mxu0 %v211
    %374 = vmatpush.bf16.msra.mxu0 %v207
    %375 = vmatpush.bf16.msra.mxu0 %v203
    %376 = vmatpush.bf16.msra.mxu0 %v199
    %377 = vmatpush.bf16.msra.mxu0 %v195
    %378 = vmatpush.bf16.msra.mxu0 %v191
    %379 = vmatmul.bf16.gmra.mxu0 %v331
    %v380 = vpop.f32.mrf.mxu0
    %v381 = vadd.f32 0.0, %v380
    %v382 = vpop.f32.mrf.mxu0
    %383 = vdwg.mxu0
    %v384 = vadd.f32 %v327, %v342
    %v385 = vadd.f32 %v328, %v355
    %v386 = vadd.f32 %v329, %v368
    %v387 = vadd.f32 %v330, %v381
    %v388 = vmul.f32 %v384, 0.5
    %v389 = vtanh.pop %v388
    %v390 = vmul.f32 %v389, 0.5
    %v391 = vadd.f32 %v390, 0.5
    %v392 = vmul.f32 %v385, 0.5
    %v393 = vtanh.pop %v392
    %v394 = vmul.f32 %v393, 0.5
    %v395 = vadd.f32 %v394, 0.5
    %v396 = vtanh.pop %v386
    %v397 = vmul.f32 %v387, 0.5
    %v398 = vtanh.pop %v397
    %v399 = vmul.f32 %v398, 0.5
    %v400 = vadd.f32 %v399, 0.5
    %v401 = vmul.f32 %v395, %v323
    %v402 = vmul.f32 %v391, %v396
    %v403 = vadd.f32 %v401, %v402
    %v404 = vtanh.pop %v403
    %v405 = vmul.f32 %v400, %v404
    %s406 = scalar_lea.vmem [#allocation4], 64
    %v407 = vld [vmem:[%s406] sm:$0xff]
    %v408 = vld [vmem:[%s406 + $0x8] sm:$0xff]
    %v409 = vld [vmem:[%s406 + $0x10] sm:$0xff]
    %v410 = vld [vmem:[%s406 + $0x18] sm:$0xff]
    %v411 = vpack.c.bf16 %v405, %v405
    %412 = vmatpush.bf16.msra.mxu0 %v216
    %413 = vmatpush.bf16.msra.mxu0 %v212
    %414 = vmatpush.bf16.msra.mxu0 %v208
    %415 = vmatpush.bf16.msra.mxu0 %v204
    %416 = vmatpush.bf16.msra.mxu0 %v200
    %417 = vmatpush.bf16.msra.mxu0 %v196
    %418 = vmatpush.bf16.msra.mxu0 %v192
    %419 = vmatpush.bf16.msra.mxu0 %v188
    %420 = vmatmul.bf16.gmra.mxu0 %v411
    %v421 = vpop.f32.mrf.mxu0
    %v422 = vadd.f32 0.0, %v421
    %v423 = vpop.f32.mrf.mxu0
    %424 = vdwg.mxu0
    %425 = vmatpush.bf16.msra.mxu0 %v217
    %426 = vmatpush.bf16.msra.mxu0 %v213
    %427 = vmatpush.bf16.msra.mxu0 %v209
    %428 = vmatpush.bf16.msra.mxu0 %v205
    %429 = vmatpush.bf16.msra.mxu0 %v201
    %430 = vmatpush.bf16.msra.mxu0 %v197
    %431 = vmatpush.bf16.msra.mxu0 %v193
    %432 = vmatpush.bf16.msra.mxu0 %v189
    %433 = vmatmul.bf16.gmra.mxu0 %v411
    %v434 = vpop.f32.mrf.mxu0
    %v435 = vadd.f32 0.0, %v434
    %v436 = vpop.f32.mrf.mxu0
    %437 = vdwg.mxu0
    %438 = vmatpush.bf16.msra.mxu0 %v218
    %439 = vmatpush.bf16.msra.mxu0 %v214
    %440 = vmatpush.bf16.msra.mxu0 %v210
    %441 = vmatpush.bf16.msra.mxu0 %v206
    %442 = vmatpush.bf16.msra.mxu0 %v202
    %443 = vmatpush.bf16.msra.mxu0 %v198
    %444 = vmatpush.bf16.msra.mxu0 %v194
    %445 = vmatpush.bf16.msra.mxu0 %v190
    %446 = vmatmul.bf16.gmra.mxu0 %v411
    %v447 = vpop.f32.mrf.mxu0
    %v448 = vadd.f32 0.0, %v447
    %v449 = vpop.f32.mrf.mxu0
    %450 = vdwg.mxu0
    %451 = vmatpush.bf16.msra.mxu0 %v219
    %452 = vmatpush.bf16.msra.mxu0 %v215
    %453 = vmatpush.bf16.msra.mxu0 %v211
    %454 = vmatpush.bf16.msra.mxu0 %v207
    %455 = vmatpush.bf16.msra.mxu0 %v203
    %456 = vmatpush.bf16.msra.mxu0 %v199
    %457 = vmatpush.bf16.msra.mxu0 %v195
    %458 = vmatpush.bf16.msra.mxu0 %v191
    %459 = vmatmul.bf16.gmra.mxu0 %v411
    %v460 = vpop.f32.mrf.mxu0
    %v461 = vadd.f32 0.0, %v460
    %v462 = vpop.f32.mrf.mxu0
    %463 = vdwg.mxu0
    %v464 = vadd.f32 %v407, %v422
    %v465 = vadd.f32 %v408, %v435
    %v466 = vadd.f32 %v409, %v448
    %v467 = vadd.f32 %v410, %v461
    %v468 = vmul.f32 %v464, 0.5
    %v469 = vtanh.pop %v468
    %v470 = vmul.f32 %v469, 0.5
    %v471 = vadd.f32 %v470, 0.5
    %v472 = vmul.f32 %v465, 0.5
    %v473 = vtanh.pop %v472
    %v474 = vmul.f32 %v473, 0.5
    %v475 = vadd.f32 %v474, 0.5
    %v476 = vtanh.pop %v466
    %v477 = vmul.f32 %v467, 0.5
    %v478 = vtanh.pop %v477
    %v479 = vmul.f32 %v478, 0.5
    %v480 = vadd.f32 %v479, 0.5
    %v481 = vmul.f32 %v475, %v403
    %v482 = vmul.f32 %v471, %v476
    %v483 = vadd.f32 %v481, %v482
    %v484 = vtanh.pop %v483
    %v485 = vmul.f32 %v480, %v484
    %s486 = scalar_lea.vmem [#allocation4], 96
    %v487 = vld [vmem:[%s486] sm:$0xff]
    %v488 = vld [vmem:[%s486 + $0x8] sm:$0xff]
    %v489 = vld [vmem:[%s486 + $0x10] sm:$0xff]
    %v490 = vld [vmem:[%s486 + $0x18] sm:$0xff]
    %v491 = vpack.c.bf16 %v485, %v485
    %492 = vmatpush.bf16.msra.mxu0 %v216
    %493 = vmatpush.bf16.msra.mxu0 %v212
    %494 = vmatpush.bf16.msra.mxu0 %v208
    %495 = vmatpush.bf16.msra.mxu0 %v204
    %496 = vmatpush.bf16.msra.mxu0 %v200
    %497 = vmatpush.bf16.msra.mxu0 %v196
    %498 = vmatpush.bf16.msra.mxu0 %v192
    %499 = vmatpush.bf16.msra.mxu0 %v188
    %500 = vmatmul.bf16.gmra.mxu0 %v491
    %v501 = vpop.f32.mrf.mxu0
    %v502 = vadd.f32 0.0, %v501
    %v503 = vpop.f32.mrf.mxu0
    %504 = vdwg.mxu0
    %505 = vmatpush.bf16.msra.mxu0 %v217
    %506 = vmatpush.bf16.msra.mxu0 %v213
    %507 = vmatpush.bf16.msra.mxu0 %v209
    %508 = vmatpush.bf16.msra.mxu0 %v205
    %509 = vmatpush.bf16.msra.mxu0 %v201
    %510 = vmatpush.bf16.msra.mxu0 %v197
    %511 = vmatpush.bf16.msra.mxu0 %v193
    %512 = vmatpush.bf16.msra.mxu0 %v189
    %513 = vmatmul.bf16.gmra.mxu0 %v491
    %v514 = vpop.f32.mrf.mxu0
    %v515 = vadd.f32 0.0, %v514
    %v516 = vpop.f32.mrf.mxu0
    %517 = vdwg.mxu0
    %518 = vmatpush.bf16.msra.mxu0 %v218
    %519 = vmatpush.bf16.msra.mxu0 %v214
    %520 = vmatpush.bf16.msra.mxu0 %v210
    %521 = vmatpush.bf16.msra.mxu0 %v206
    %522 = vmatpush.bf16.msra.mxu0 %v202
    %523 = vmatpush.bf16.msra.mxu0 %v198
    %524 = vmatpush.bf16.msra.mxu0 %v194
    %525 = vmatpush.bf16.msra.mxu0 %v190
    %526 = vmatmul.bf16.gmra.mxu0 %v491
    %v527 = vpop.f32.mrf.mxu0
    %v528 = vadd.f32 0.0, %v527
    %v529 = vpop.f32.mrf.mxu0
    %530 = vdwg.mxu0
    %531 = vmatpush.bf16.msra.mxu0 %v219
    %532 = vmatpush.bf16.msra.mxu0 %v215
    %533 = vmatpush.bf16.msra.mxu0 %v211
    %534 = vmatpush.bf16.msra.mxu0 %v207
    %535 = vmatpush.bf16.msra.mxu0 %v203
    %536 = vmatpush.bf16.msra.mxu0 %v199
    %537 = vmatpush.bf16.msra.mxu0 %v195
    %538 = vmatpush.bf16.msra.mxu0 %v191
    %539 = vmatmul.bf16.gmra.mxu0 %v491
    %v540 = vpop.f32.mrf.mxu0
    %v541 = vadd.f32 0.0, %v540
    %v542 = vpop.f32.mrf.mxu0
    %543 = vdwg.mxu0
    %v544 = vadd.f32 %v487, %v502
    %v545 = vadd.f32 %v488, %v515
    %v546 = vadd.f32 %v489, %v528
    %v547 = vadd.f32 %v490, %v541
    %v548 = vmul.f32 %v544, 0.5
    %v549 = vtanh.pop %v548
    %v550 = vmul.f32 %v549, 0.5
    %v551 = vadd.f32 %v550, 0.5
    %v552 = vmul.f32 %v545, 0.5
    %v553 = vtanh.pop %v552
    %v554 = vmul.f32 %v553, 0.5
    %v555 = vadd.f32 %v554, 0.5
    %v556 = vtanh.pop %v546
    %v557 = vmul.f32 %v547, 0.5
    %v558 = vtanh.pop %v557
    %v559 = vmul.f32 %v558, 0.5
    %v560 = vadd.f32 %v559, 0.5
    %v561 = vmul.f32 %v555, %v483
    %v562 = vmul.f32 %v551, %v556
    %v563 = vadd.f32 %v561, %v562
    %v564 = vtanh.pop %v563
    %v565 = vmul.f32 %v560, %v564
    %s566 = scalar_lea.vmem [#allocation4], 128
    %v567 = vld [vmem:[%s566] sm:$0xff]
    %v568 = vld [vmem:[%s566 + $0x8] sm:$0xff]
    %v569 = vld [vmem:[%s566 + $0x10] sm:$0xff]
    %v570 = vld [vmem:[%s566 + $0x18] sm:$0xff]
    %v571 = vpack.c.bf16 %v565, %v565
    %572 = vmatpush.bf16.msra.mxu0 %v216
    %573 = vmatpush.bf16.msra.mxu0 %v212
    %574 = vmatpush.bf16.msra.mxu0 %v208
    %575 = vmatpush.bf16.msra.mxu0 %v204
    %576 = vmatpush.bf16.msra.mxu0 %v200
    %577 = vmatpush.bf16.msra.mxu0 %v196
    %578 = vmatpush.bf16.msra.mxu0 %v192
    %579 = vmatpush.bf16.msra.mxu0 %v188
    %580 = vmatmul.bf16.gmra.mxu0 %v571
    %v581 = vpop.f32.mrf.mxu0
    %v582 = vadd.f32 0.0, %v581
    %v583 = vpop.f32.mrf.mxu0
    %584 = vdwg.mxu0
    %585 = vmatpush.bf16.msra.mxu0 %v217
    %586 = vmatpush.bf16.msra.mxu0 %v213
    %587 = vmatpush.bf16.msra.mxu0 %v209
    %588 = vmatpush.bf16.msra.mxu0 %v205
    %589 = vmatpush.bf16.msra.mxu0 %v201
    %590 = vmatpush.bf16.msra.mxu0 %v197
    %591 = vmatpush.bf16.msra.mxu0 %v193
    %592 = vmatpush.bf16.msra.mxu0 %v189
    %593 = vmatmul.bf16.gmra.mxu0 %v571
    %v594 = vpop.f32.mrf.mxu0
    %v595 = vadd.f32 0.0, %v594
    %v596 = vpop.f32.mrf.mxu0
    %597 = vdwg.mxu0
    %598 = vmatpush.bf16.msra.mxu0 %v218
    %599 = vmatpush.bf16.msra.mxu0 %v214
    %600 = vmatpush.bf16.msra.mxu0 %v210
    %601 = vmatpush.bf16.msra.mxu0 %v206
    %602 = vmatpush.bf16.msra.mxu0 %v202
    %603 = vmatpush.bf16.msra.mxu0 %v198
    %604 = vmatpush.bf16.msra.mxu0 %v194
    %605 = vmatpush.bf16.msra.mxu0 %v190
    %606 = vmatmul.bf16.gmra.mxu0 %v571
    %v607 = vpop.f32.mrf.mxu0
    %v608 = vadd.f32 0.0, %v607
    %v609 = vpop.f32.mrf.mxu0
    %610 = vdwg.mxu0
    %611 = vmatpush.bf16.msra.mxu0 %v219
    %612 = vmatpush.bf16.msra.mxu0 %v215
    %613 = vmatpush.bf16.msra.mxu0 %v211
    %614 = vmatpush.bf16.msra.mxu0 %v207
    %615 = vmatpush.bf16.msra.mxu0 %v203
    %616 = vmatpush.bf16.msra.mxu0 %v199
    %617 = vmatpush.bf16.msra.mxu0 %v195
    %618 = vmatpush.bf16.msra.mxu0 %v191
    %619 = vmatmul.bf16.gmra.mxu0 %v571
    %v620 = vpop.f32.mrf.mxu0
    %v621 = vadd.f32 0.0, %v620
    %v622 = vpop.f32.mrf.mxu0
    %623 = vdwg.mxu0
    %v624 = vadd.f32 %v567, %v582
    %v625 = vadd.f32 %v568, %v595
    %v626 = vadd.f32 %v569, %v608
    %v627 = vadd.f32 %v570, %v621
    %v628 = vmul.f32 %v624, 0.5
    %v629 = vtanh.pop %v628
    %v630 = vmul.f32 %v629, 0.5
    %v631 = vadd.f32 %v630, 0.5
    %v632 = vmul.f32 %v625, 0.5
    %v633 = vtanh.pop %v632
    %v634 = vmul.f32 %v633, 0.5
    %v635 = vadd.f32 %v634, 0.5
    %v636 = vtanh.pop %v626
    %v637 = vmul.f32 %v627, 0.5
    %v638 = vtanh.pop %v637
    %v639 = vmul.f32 %v638, 0.5
    %v640 = vadd.f32 %v639, 0.5
    %v641 = vmul.f32 %v635, %v563
    %v642 = vmul.f32 %v631, %v636
    %v643 = vadd.f32 %v641, %v642
    %v644 = vtanh.pop %v643
    %v645 = vmul.f32 %v640, %v644
    %s646 = scalar_lea.vmem [#allocation4], 160
    %v647 = vld [vmem:[%s646] sm:$0xff]
    %v648 = vld [vmem:[%s646 + $0x8] sm:$0xff]
    %v649 = vld [vmem:[%s646 + $0x10] sm:$0xff]
    %v650 = vld [vmem:[%s646 + $0x18] sm:$0xff]
    %v651 = vpack.c.bf16 %v645, %v645
    %652 = vmatpush.bf16.msra.mxu0 %v216
    %653 = vmatpush.bf16.msra.mxu0 %v212
    %654 = vmatpush.bf16.msra.mxu0 %v208
    %655 = vmatpush.bf16.msra.mxu0 %v204
    %656 = vmatpush.bf16.msra.mxu0 %v200
    %657 = vmatpush.bf16.msra.mxu0 %v196
    %658 = vmatpush.bf16.msra.mxu0 %v192
    %659 = vmatpush.bf16.msra.mxu0 %v188
    %660 = vmatmul.bf16.gmra.mxu0 %v651
    %v661 = vpop.f32.mrf.mxu0
    %v662 = vadd.f32 0.0, %v661
    %v663 = vpop.f32.mrf.mxu0
    %664 = vdwg.mxu0
    %665 = vmatpush.bf16.msra.mxu0 %v217
    %666 = vmatpush.bf16.msra.mxu0 %v213
    %667 = vmatpush.bf16.msra.mxu0 %v209
    %668 = vmatpush.bf16.msra.mxu0 %v205
    %669 = vmatpush.bf16.msra.mxu0 %v201
    %670 = vmatpush.bf16.msra.mxu0 %v197
    %671 = vmatpush.bf16.msra.mxu0 %v193
    %672 = vmatpush.bf16.msra.mxu0 %v189
    %673 = vmatmul.bf16.gmra.mxu0 %v651
    %v674 = vpop.f32.mrf.mxu0
    %v675 = vadd.f32 0.0, %v674
    %v676 = vpop.f32.mrf.mxu0
    %677 = vdwg.mxu0
    %678 = vmatpush.bf16.msra.mxu0 %v218
    %679 = vmatpush.bf16.msra.mxu0 %v214
    %680 = vmatpush.bf16.msra.mxu0 %v210
    %681 = vmatpush.bf16.msra.mxu0 %v206
    %682 = vmatpush.bf16.msra.mxu0 %v202
    %683 = vmatpush.bf16.msra.mxu0 %v198
    %684 = vmatpush.bf16.msra.mxu0 %v194
    %685 = vmatpush.bf16.msra.mxu0 %v190
    %686 = vmatmul.bf16.gmra.mxu0 %v651
    %v687 = vpop.f32.mrf.mxu0
    %v688 = vadd.f32 0.0, %v687
    %v689 = vpop.f32.mrf.mxu0
    %690 = vdwg.mxu0
    %691 = vmatpush.bf16.msra.mxu0 %v219
    %692 = vmatpush.bf16.msra.mxu0 %v215
    %693 = vmatpush.bf16.msra.mxu0 %v211
    %694 = vmatpush.bf16.msra.mxu0 %v207
    %695 = vmatpush.bf16.msra.mxu0 %v203
    %696 = vmatpush.bf16.msra.mxu0 %v199
    %697 = vmatpush.bf16.msra.mxu0 %v195
    %698 = vmatpush.bf16.msra.mxu0 %v191
    %699 = vmatmul.bf16.gmra.mxu0 %v651
    %v700 = vpop.f32.mrf.mxu0
    %v701 = vadd.f32 0.0, %v700
    %v702 = vpop.f32.mrf.mxu0
    %703 = vdwg.mxu0
    %v704 = vadd.f32 %v647, %v662
    %v705 = vadd.f32 %v648, %v675
    %v706 = vadd.f32 %v649, %v688
    %v707 = vadd.f32 %v650, %v701
    %v708 = vmul.f32 %v704, 0.5
    %v709 = vtanh.pop %v708
    %v710 = vmul.f32 %v709, 0.5
    %v711 = vadd.f32 %v710, 0.5
    %v712 = vmul.f32 %v705, 0.5
    %v713 = vtanh.pop %v712
    %v714 = vmul.f32 %v713, 0.5
    %v715 = vadd.f32 %v714, 0.5
    %v716 = vtanh.pop %v706
    %v717 = vmul.f32 %v707, 0.5
    %v718 = vtanh.pop %v717
    %v719 = vmul.f32 %v718, 0.5
    %v720 = vadd.f32 %v719, 0.5
    %v721 = vmul.f32 %v715, %v643
    %v722 = vmul.f32 %v711, %v716
    %v723 = vadd.f32 %v721, %v722
    %v724 = vtanh.pop %v723
    %v725 = vmul.f32 %v720, %v724
    %s726 = scalar_lea.vmem [#allocation4], 192
    %v727 = vld [vmem:[%s726] sm:$0xff]
    %v728 = vld [vmem:[%s726 + $0x8] sm:$0xff]
    %v729 = vld [vmem:[%s726 + $0x10] sm:$0xff]
    %v730 = vld [vmem:[%s726 + $0x18] sm:$0xff]
    %v731 = vpack.c.bf16 %v725, %v725
    %732 = vmatpush.bf16.msra.mxu0 %v216
    %733 = vmatpush.bf16.msra.mxu0 %v212
    %734 = vmatpush.bf16.msra.mxu0 %v208
    %735 = vmatpush.bf16.msra.mxu0 %v204
    %736 = vmatpush.bf16.msra.mxu0 %v200
    %737 = vmatpush.bf16.msra.mxu0 %v196
    %738 = vmatpush.bf16.msra.mxu0 %v192
    %739 = vmatpush.bf16.msra.mxu0 %v188
    %740 = vmatmul.bf16.gmra.mxu0 %v731
    %v741 = vpop.f32.mrf.mxu0
    %v742 = vadd.f32 0.0, %v741
    %v743 = vpop.f32.mrf.mxu0
    %744 = vdwg.mxu0
    %745 = vmatpush.bf16.msra.mxu0 %v217
    %746 = vmatpush.bf16.msra.mxu0 %v213
    %747 = vmatpush.bf16.msra.mxu0 %v209
    %748 = vmatpush.bf16.msra.mxu0 %v205
    %749 = vmatpush.bf16.msra.mxu0 %v201
    %750 = vmatpush.bf16.msra.mxu0 %v197
    %751 = vmatpush.bf16.msra.mxu0 %v193
    %752 = vmatpush.bf16.msra.mxu0 %v189
    %753 = vmatmul.bf16.gmra.mxu0 %v731
    %v754 = vpop.f32.mrf.mxu0
    %v755 = vadd.f32 0.0, %v754
    %v756 = vpop.f32.mrf.mxu0
    %757 = vdwg.mxu0
    %758 = vmatpush.bf16.msra.mxu0 %v218
    %759 = vmatpush.bf16.msra.mxu0 %v214
    %760 = vmatpush.bf16.msra.mxu0 %v210
    %761 = vmatpush.bf16.msra.mxu0 %v206
    %762 = vmatpush.bf16.msra.mxu0 %v202
    %763 = vmatpush.bf16.msra.mxu0 %v198
    %764 = vmatpush.bf16.msra.mxu0 %v194
    %765 = vmatpush.bf16.msra.mxu0 %v190
    %766 = vmatmul.bf16.gmra.mxu0 %v731
    %v767 = vpop.f32.mrf.mxu0
    %v768 = vadd.f32 0.0, %v767
    %v769 = vpop.f32.mrf.mxu0
    %770 = vdwg.mxu0
    %771 = vmatpush.bf16.msra.mxu0 %v219
    %772 = vmatpush.bf16.msra.mxu0 %v215
    %773 = vmatpush.bf16.msra.mxu0 %v211
    %774 = vmatpush.bf16.msra.mxu0 %v207
    %775 = vmatpush.bf16.msra.mxu0 %v203
    %776 = vmatpush.bf16.msra.mxu0 %v199
    %777 = vmatpush.bf16.msra.mxu0 %v195
    %778 = vmatpush.bf16.msra.mxu0 %v191
    %779 = vmatmul.bf16.gmra.mxu0 %v731
    %v780 = vpop.f32.mrf.mxu0
    %v781 = vadd.f32 0.0, %v780
    %v782 = vpop.f32.mrf.mxu0
    %783 = vdwg.mxu0
    %v784 = vadd.f32 %v727, %v742
    %v785 = vadd.f32 %v728, %v755
    %v786 = vadd.f32 %v729, %v768
    %v787 = vadd.f32 %v730, %v781
    %v788 = vmul.f32 %v784, 0.5
    %v789 = vtanh.pop %v788
    %v790 = vmul.f32 %v789, 0.5
    %v791 = vadd.f32 %v790, 0.5
    %v792 = vmul.f32 %v785, 0.5
    %v793 = vtanh.pop %v792
    %v794 = vmul.f32 %v793, 0.5
    %v795 = vadd.f32 %v794, 0.5
    %v796 = vtanh.pop %v786
    %v797 = vmul.f32 %v787, 0.5
    %v798 = vtanh.pop %v797
    %v799 = vmul.f32 %v798, 0.5
    %v800 = vadd.f32 %v799, 0.5
    %v801 = vmul.f32 %v795, %v723
    %v802 = vmul.f32 %v791, %v796
    %v803 = vadd.f32 %v801, %v802
    %v804 = vtanh.pop %v803
    %v805 = vmul.f32 %v800, %v804
    %s806 = scalar_lea.vmem [#allocation4], 224
    %v807 = vld [vmem:[%s806] sm:$0xff]
    %v808 = vld [vmem:[%s806 + $0x8] sm:$0xff]
    %v809 = vld [vmem:[%s806 + $0x10] sm:$0xff]
    %v810 = vld [vmem:[%s806 + $0x18] sm:$0xff]
    %v811 = vpack.c.bf16 %v805, %v805
    %812 = vmatpush.bf16.msra.mxu0 %v216
    %813 = vmatpush.bf16.msra.mxu0 %v212
    %814 = vmatpush.bf16.msra.mxu0 %v208
    %815 = vmatpush.bf16.msra.mxu0 %v204
    %816 = vmatpush.bf16.msra.mxu0 %v200
    %817 = vmatpush.bf16.msra.mxu0 %v196
    %818 = vmatpush.bf16.msra.mxu0 %v192
    %819 = vmatpush.bf16.msra.mxu0 %v188
    %820 = vmatmul.bf16.gmra.mxu0 %v811
    %v821 = vpop.f32.mrf.mxu0
    %v822 = vadd.f32 0.0, %v821
    %v823 = vpop.f32.mrf.mxu0
    %824 = vdwg.mxu0
    %825 = vmatpush.bf16.msra.mxu0 %v217
    %826 = vmatpush.bf16.msra.mxu0 %v213
    %827 = vmatpush.bf16.msra.mxu0 %v209
    %828 = vmatpush.bf16.msra.mxu0 %v205
    %829 = vmatpush.bf16.msra.mxu0 %v201
    %830 = vmatpush.bf16.msra.mxu0 %v197
    %831 = vmatpush.bf16.msra.mxu0 %v193
    %832 = vmatpush.bf16.msra.mxu0 %v189
    %833 = vmatmul.bf16.gmra.mxu0 %v811
    %v834 = vpop.f32.mrf.mxu0
    %v835 = vadd.f32 0.0, %v834
    %v836 = vpop.f32.mrf.mxu0
    %837 = vdwg.mxu0
    %838 = vmatpush.bf16.msra.mxu0 %v218
    %839 = vmatpush.bf16.msra.mxu0 %v214
    %840 = vmatpush.bf16.msra.mxu0 %v210
    %841 = vmatpush.bf16.msra.mxu0 %v206
    %842 = vmatpush.bf16.msra.mxu0 %v202
    %843 = vmatpush.bf16.msra.mxu0 %v198
    %844 = vmatpush.bf16.msra.mxu0 %v194
    %845 = vmatpush.bf16.msra.mxu0 %v190
    %846 = vmatmul.bf16.gmra.mxu0 %v811
    %v847 = vpop.f32.mrf.mxu0
    %v848 = vadd.f32 0.0, %v847
    %v849 = vpop.f32.mrf.mxu0
    %850 = vdwg.mxu0
    %851 = vmatpush.bf16.msra.mxu0 %v219
    %852 = vmatpush.bf16.msra.mxu0 %v215
    %853 = vmatpush.bf16.msra.mxu0 %v211
    %854 = vmatpush.bf16.msra.mxu0 %v207
    %855 = vmatpush.bf16.msra.mxu0 %v203
    %856 = vmatpush.bf16.msra.mxu0 %v199
    %857 = vmatpush.bf16.msra.mxu0 %v195
    %858 = vmatpush.bf16.msra.mxu0 %v191
    %859 = vmatmul.bf16.gmra.mxu0 %v811
    %v860 = vpop.f32.mrf.mxu0
    %v861 = vadd.f32 0.0, %v860
    %v862 = vpop.f32.mrf.mxu0
    %863 = vdwg.mxu0
    %v864 = vadd.f32 %v807, %v822
    %v865 = vadd.f32 %v808, %v835
    %v866 = vadd.f32 %v809, %v848
    %v867 = vadd.f32 %v810, %v861
    %v868 = vmul.f32 %v864, 0.5
    %v869 = vtanh.pop %v868
    %v870 = vmul.f32 %v869, 0.5
    %v871 = vadd.f32 %v870, 0.5
    %v872 = vmul.f32 %v865, 0.5
    %v873 = vtanh.pop %v872
    %v874 = vmul.f32 %v873, 0.5
    %v875 = vadd.f32 %v874, 0.5
    %v876 = vtanh.pop %v866
    %v877 = vmul.f32 %v867, 0.5
    %v878 = vtanh.pop %v877
    %v879 = vmul.f32 %v878, 0.5
    %v880 = vadd.f32 %v879, 0.5
    %v881 = vmul.f32 %v875, %v803
    %v882 = vmul.f32 %v871, %v876
    %v883 = vadd.f32 %v881, %v882
    %v884 = vtanh.pop %v883
    %v885 = vmul.f32 %v880, %v884
    %886 = vst [vmem:[#allocation2] sm:$0xff] %v885
    %887 = vst [vmem:[#allocation3] sm:$0xff] %v883
    // Predicated region
    $region22: #{tpu_custom_call.1} parent=1 // pred_check
      %p888 = pneg %p47
    $region23: #{tpu_custom_call.1} parent=1 // pred_check_branch
      %890 = sbr.rel (%p888) target = $region25
    $region24: #{tpu_custom_call.1} parent=1 // pred_region
      %891 = vst [vmem:[#allocation9] sm:$0xff] %v885
      %892 = vst [vmem:[#allocation10] sm:$0xff] %v883
    $region25: #{tpu_custom_call.1} parent=1 // pred_fallthru
      _
    // Predicated region
    $region26: #{tpu_custom_call.1} parent=1 // pred_check
      _
    $region27: #{tpu_custom_call.1} parent=1 // pred_check_branch
      %894 = sbr.rel (0) target = $region29
    $region28: #{tpu_custom_call.1} parent=1 // pred_region
      %896 = vsyncadd [#allocation6], 0
      %s898 = sshll.u32 [#allocation9], 4
      %s899 = int_to_ptr.vmem [resolvable:$true] %s898
      %s900 = sshll.u32 %s2, 4
      %s901 = int_to_ptr.hbm [resolvable:$true] %s900
      %903 = dma.vmem_to_hbm [thread:$0]  %s899, 128, %s901, [#allocation6]
    $region29: #{tpu_custom_call.1} parent=1 // pred_fallthru
      _
    // Predicated region
    $region30: #{tpu_custom_call.1} parent=1 // pred_check
      _
    $region31: #{tpu_custom_call.1} parent=1 // pred_check_branch
      %905 = sbr.rel (0) target = $region33
    $region32: #{tpu_custom_call.1} parent=1 // pred_region
      %907 = vsyncadd [#allocation11], 0
      %s909 = sshll.u32 [#allocation10], 4
      %s910 = int_to_ptr.vmem [resolvable:$true] %s909
      %s911 = sshll.u32 %s3, 4
      %s912 = int_to_ptr.hbm [resolvable:$true] %s911
      %914 = dma.vmem_to_hbm [thread:$0]  %s910, 128, %s912, [#allocation11]
    $region33: #{tpu_custom_call.1} parent=1 // pred_fallthru
      _
    // Predicated region
    $region34: #{tpu_custom_call.1} parent=1 // pred_check
      _
    $region35: #{tpu_custom_call.1} parent=1 // pred_check_branch
      %916 = sbr.rel (0) target = $region37
    $region36: #{tpu_custom_call.1} parent=1 // pred_region
      %918 = dma.done [#allocation6], 128
    $region37: #{tpu_custom_call.1} parent=1 // pred_fallthru
      _
    // Predicated region
    $region38: #{tpu_custom_call.1} parent=1 // pred_check
      _
    $region39: #{tpu_custom_call.1} parent=1 // pred_check_branch
      %920 = sbr.rel (0) target = $region41
    $region40: #{tpu_custom_call.1} parent=1 // pred_region
      %922 = dma.done [#allocation11], 128
    $region41: #{tpu_custom_call.1} parent=1 // pred_fallthru
      _
    %923 = vsyncpa [#allocation5], 1
    %924 = vsyncpa [#allocation8], 1
    %925 = vsyncpa [#allocation6], 1
    %926 = vsyncpa [#allocation11], 1

</llo_original>
